<compile_context>
chip_gen: v6e
topology: v6e:2x2x1
jax: 0.10.0
libtpu: 0.0.40
codegen_flags: <defaults>
</compile_context>

<pallas_src>
import functools

import numpy as np
import jax
import jax.numpy as jnp
from jax.experimental import pallas as pl
from jax.experimental.pallas import tpu as pltpu


# ----------------------------- Pallas kernel ------------------------------- #
def _attnpool_kernel(x_ref, pos0_ref, posr_ref,
                     wq_ref, bq_ref, wkv_ref, bkv_ref,
                     wc_ref, bc_ref, hsum_ref, hexp_ref,
                     out_ref, *, scale):
    f32 = jnp.float32
    bf16 = jnp.bfloat16
    B, S, C = x_ref.shape
    Hh = hsum_ref.shape[-1]

    x = x_ref[...]                                              # (B, S, C) bf16

    # ---- mean (query) token: f32 reduction over S, + pos, one bf16 cast ----
    mean_f32 = jnp.mean(x.astype(f32), axis=1) + pos0_ref[...].astype(f32)  # (B, C)
    mean_bf = mean_f32.astype(bf16)                             # (B, C)

    # ---- spatial tokens (bf16 add; the projections consume bf16 anyway) ----
    spat_bf = (x + posr_ref[...]).reshape(B * S, C)             # (B*S, C) bf16

    # ---- fused k|v projection of spatial tokens (dominant matmul) ----
    kv_s = jnp.dot(spat_bf, wkv_ref[...],
                   preferred_element_type=f32) + bkv_ref[...]   # (B*S, 2C) f32
    k_s = kv_s[:, :C].reshape(B, S, C)                          # (B, S, C) f32
    v_s = kv_s[:, C:].reshape(B, S, C)                          # (B, S, C) f32

    # ---- mean-token q / k / v (tiny M=B matmuls, wkv reused) ----
    q0 = (jnp.dot(mean_bf, wq_ref[...],
                  preferred_element_type=f32) + bq_ref[...]) * scale   # (B, C)
    kv_m = jnp.dot(mean_bf, wkv_ref[...],
                   preferred_element_type=f32) + bkv_ref[...]          # (B, 2C)
    k_m = kv_m[:, :C]                                            # (B, C)
    v_m = kv_m[:, C:]                                            # (B, C)

    # ---- per-head logits: (q*k) summed per head via 0/1 head-sum matmul ----
    qk = (k_s * q0[:, None, :]).astype(bf16)                     # (B, S, C)
    sc_s = jnp.dot(qk.reshape(B * S, C), hsum_ref[...],
                   preferred_element_type=f32).reshape(B, S, Hh)  # (B, S, Hh)
    sc_m = jnp.dot((k_m * q0).astype(bf16), hsum_ref[...],
                   preferred_element_type=f32)                    # (B, Hh)

    # ---- softmax over the S+1 logits (all f32) ----
    m = jnp.maximum(jnp.max(sc_s, axis=1), sc_m)                  # (B, Hh)
    e_s = jnp.exp(sc_s - m[:, None, :])                           # (B, S, Hh)
    e_m = jnp.exp(sc_m - m)                                       # (B, Hh)
    inv = 1.0 / (jnp.sum(e_s, axis=1) + e_m)                      # (B, Hh)
    attn_s = e_s * inv[:, None, :]                                # (B, S, Hh)
    attn_m = e_m * inv                                            # (B, Hh)

    # ---- weighted value sum: broadcast head weights back to channels ----
    w_s = jnp.dot(attn_s.reshape(B * S, Hh).astype(bf16), hexp_ref[...],
                  preferred_element_type=f32).reshape(B, S, C)    # (B, S, C)
    w_m = jnp.dot(attn_m.astype(bf16), hexp_ref[...],
                  preferred_element_type=f32)                     # (B, C)
    o = jnp.sum(w_s * v_s, axis=1) + w_m * v_m                    # (B, C) f32

    # ---- output projection ----
    out = jnp.dot(o.astype(bf16), wc_ref[...],
                  preferred_element_type=f32) + bc_ref[...]       # (B, Dout)
    out_ref[...] = out.astype(out_ref.dtype)


# ------------------------------ host wrapper ------------------------------- #
def attention_pool_pallas(x_nchw, params, num_heads, *, batch_tile=8):
    N, C, H, W = x_nchw.shape
    S = H * W
    assert C % num_heads == 0
    D = C // num_heads
    Dout = params["wc"].shape[0]
    scale = float(D) ** -0.5

    f32, bf16 = jnp.float32, jnp.bfloat16

    # NCHW -> (N, S, C): channels on the lane axis; cast to bf16 in the same
    # fused op so only bf16 bytes are materialized in HBM.
    x_flat = jnp.transpose(x_nchw, (0, 2, 3, 1)).reshape(N, S, C).astype(bf16)

    b_tile = min(batch_tile, N)
    n_blocks = -(-N // b_tile)
    n_pad = n_blocks * b_tile
    if n_pad != N:
        x_flat = jnp.pad(x_flat, ((0, n_pad - N), (0, 0), (0, 0)))

    pos = params["pos"]
    pos0 = pos[0:1].astype(bf16)                                 # (1, C)
    posr = pos[1:].astype(bf16)                                  # (S, C)

    # PyTorch nn.Linear weights are (out, in); transpose for x @ W form.
    wq = params["wq"].T.astype(bf16)                             # (C, C)
    # Fused k|v weight for the dominant spatial matmul; reused for the mean
    # token so wk/wv are resident only once.
    wkv = jnp.concatenate([params["wk"].T, params["wv"].T], axis=1).astype(bf16)  # (C, 2C)
    wc = params["wc"].T.astype(bf16)                             # (C, Dout)
    bq = params["bq"][None, :].astype(f32)                       # (1, C)
    bkv = jnp.concatenate([params["bk"], params["bv"]])[None, :].astype(f32)      # (1, 2C)
    bc = params["bc"][None, :].astype(f32)                       # (1, Dout)

    # Tiny 0/1 head bookkeeping matrices (bf16 is exact for 0/1 values).
    head_of_c = np.arange(C) // D
    hsum_np = (head_of_c[:, None] == np.arange(num_heads)[None, :]).astype(np.float32)
    hsum = jnp.asarray(hsum_np, dtype=bf16)                      # (C, Hh)
    hexp = jnp.asarray(np.ascontiguousarray(hsum_np.T), dtype=bf16)  # (Hh, C)

    consts = (pos0, posr, wq, bq, wkv, bkv, wc, bc, hsum, hexp)
    const_bytes = sum(int(np.prod(a.shape)) * a.dtype.itemsize for a in consts)
    x_tile_bytes = b_tile * S * C * 2
    out_tile_bytes = b_tile * Dout * 4
    # Rough bound on f32/bf16 temporaries inside the kernel body.
    interm_bytes = b_tile * S * (28 * C + 8 * num_heads)

    def build_and_run(single_buffer_consts):
        const_kw = {"pipeline_mode": pl.Buffered(1)} if single_buffer_consts else {}

        def const_spec(arr):
            nd = arr.ndim
            return pl.BlockSpec(arr.shape, lambda b, _nd=nd: (0,) * _nd, **const_kw)

        buf = 1 if single_buffer_consts else 2
        working = (const_bytes * buf + 2 * x_tile_bytes
                   + 2 * out_tile_bytes + interm_bytes)
        vmem_limit = int(min(64 << 20, max(32 << 20, int(working * 1.3))))

        call = pl.pallas_call(
            functools.partial(_attnpool_kernel, scale=scale),
            out_shape=jax.ShapeDtypeStruct((n_pad, Dout), jnp.float32),
            grid=(n_blocks,),
            in_specs=[
                pl.BlockSpec((b_tile, S, C), lambda b: (b, 0, 0)),
                const_spec(pos0), const_spec(posr),
                const_spec(wq), const_spec(bq),
                const_spec(wkv), const_spec(bkv),
                const_spec(wc), const_spec(bc),
                const_spec(hsum), const_spec(hexp),
            ],
            out_specs=pl.BlockSpec((b_tile, Dout), lambda b: (b, 0)),
            compiler_params=pltpu.CompilerParams(
                dimension_semantics=("parallel",),
                vmem_limit_bytes=vmem_limit),
        )
        res = call(x_flat, pos0, posr, wq, bq, wkv, bkv, wc, bc, hsum, hexp)
        return jax.block_until_ready(res)

    try:
        out = build_and_run(True)
    except Exception:
        # Fallback for Pallas versions without single-buffered pipeline_mode.
        out = build_and_run(False)

    return out[:N]


# ------------------------ pure-JAX reference (f32) ------------------------- #
def attention_pool_reference(x, params, num_heads):
    hi = jax.lax.Precision.HIGHEST
    N, C, H, W = x.shape
    S = H * W
    t = x.reshape(N, C, S).transpose(2, 0, 1)                    # (S, N, C)
    t = jnp.concatenate([t.mean(axis=0, keepdims=True), t], axis=0)
    t = t + params["pos"][:, None, :]                            # (S+1, N, C)

    def lin(a, w, b):
        return jnp.einsum("lnc,oc->lno", a, w, precision=hi) + b

    q = lin(t, params["wq"], params["bq"])
    k = lin(t, params["wk"], params["bk"])
    v = lin(t, params["wv"], params["bv"])

    D = C // num_heads
    L = S + 1
    q = q.reshape(L, N, num_heads, D) * (float(D) ** -0.5)
    k = k.reshape(L, N, num_heads, D)
    v = v.reshape(L, N, num_heads, D)
    logits = jnp.einsum("qnhd,knhd->nhqk", q, k, precision=hi)
    attn = jax.nn.softmax(logits, axis=-1)
    o = jnp.einsum("nhqk,knhd->qnhd", attn, v, precision=hi).reshape(L, N, C)
    out = jnp.einsum("lnc,oc->lno", o, params["wc"], precision=hi) + params["bc"]
    return out[0]                                                # (N, Dout)


# ------------------------------ param init --------------------------------- #
def init_params(key, spacial_dim, embed_dim, output_dim):
    S = spacial_dim * spacial_dim
    ks = jax.random.split(key, 9)

    def linear_init(kw, kb, out_f, in_f):
        w = jax.random.normal(kw, (out_f, in_f), jnp.float32) / np.sqrt(in_f)
        b = 0.1 * jax.random.normal(kb, (out_f,), jnp.float32)
        return w, b

    pos = jax.random.normal(ks[0], (S + 1, embed_dim), jnp.float32) / np.sqrt(embed_dim)
    wq, bq = linear_init(ks[1], ks[2], embed_dim, embed_dim)
    wk, bk = linear_init(ks[3], ks[4], embed_dim, embed_dim)
    wv, bv = linear_init(ks[5], ks[6], embed_dim, embed_dim)
    wc, bc = linear_init(ks[7], ks[8], output_dim, embed_dim)
    return {"pos": pos, "wq": wq, "bq": bq, "wk": wk, "bk": bk,
            "wv": wv, "bv": bv, "wc": wc, "bc": bc}


# ---------------------------------- main ----------------------------------- #
if __name__ == "__main__":
    N, spacial_dim, embed_dim, num_heads, output_dim = 2, 8, 32, 4, 64
    H = W = spacial_dim

    root = jax.random.PRNGKey(0)
    kx, kp = jax.random.split(root)
    x = jax.random.normal(kx, (N, embed_dim, H, W), jnp.float32)  # NCHW, like PyTorch
    params = init_params(kp, spacial_dim, embed_dim, output_dim)

    out = attention_pool_pallas(x, params, num_heads)
    out = jax.block_until_ready(out)

    ref = jax.block_until_ready(attention_pool_reference(x, params, num_heads))

    assert out.shape == (N, output_dim), out.shape
    np.testing.assert_allclose(np.asarray(out), np.asarray(ref), rtol=3e-2, atol=3e-2)
    assert np.all(np.isfinite(np.asarray(out)))
    print("KERNEL_OK")
</pallas_src>

<mosaic_0001>
module attributes {stable_mosaic.version = 11 : i64} {
  func.func @_attnpool_kernel(%arg0: i32, %arg1: memref<2x64x32xbf16, #tpu.memory_space<vmem>>, %arg2: memref<1x32xbf16, #tpu.memory_space<vmem>>, %arg3: memref<64x32xbf16, #tpu.memory_space<vmem>>, %arg4: memref<32x32xbf16, #tpu.memory_space<vmem>>, %arg5: memref<1x32xf32, #tpu.memory_space<vmem>>, %arg6: memref<32x64xbf16, #tpu.memory_space<vmem>>, %arg7: memref<1x64xf32, #tpu.memory_space<vmem>>, %arg8: memref<32x64xbf16, #tpu.memory_space<vmem>>, %arg9: memref<1x64xf32, #tpu.memory_space<vmem>>, %arg10: memref<32x4xbf16, #tpu.memory_space<vmem>>, %arg11: memref<4x32xbf16, #tpu.memory_space<vmem>>, %arg12: memref<2x64xf32, #tpu.memory_space<vmem>>) attributes {dimension_semantics = [#tpu.dimension_semantics<parallel>], iteration_bounds = array<i64: 1>, scalar_prefetch = 0 : i64, scratch_operands = 0 : i64, tpu.core_type = #tpu.core_type<tc>, window_params = [{transform_indices = @transform_0, window_bounds = array<i64: 2, 64, 32>}, {pipeline_mode = #tpu.pipeline_mode<synchronous>, transform_indices = @transform_1, window_bounds = array<i64: 1, 32>}, {pipeline_mode = #tpu.pipeline_mode<synchronous>, transform_indices = @transform_2, window_bounds = array<i64: 64, 32>}, {pipeline_mode = #tpu.pipeline_mode<synchronous>, transform_indices = @transform_3, window_bounds = array<i64: 32, 32>}, {pipeline_mode = #tpu.pipeline_mode<synchronous>, transform_indices = @transform_4, window_bounds = array<i64: 1, 32>}, {pipeline_mode = #tpu.pipeline_mode<synchronous>, transform_indices = @transform_5, window_bounds = array<i64: 32, 64>}, {pipeline_mode = #tpu.pipeline_mode<synchronous>, transform_indices = @transform_6, window_bounds = array<i64: 1, 64>}, {pipeline_mode = #tpu.pipeline_mode<synchronous>, transform_indices = @transform_7, window_bounds = array<i64: 32, 64>}, {pipeline_mode = #tpu.pipeline_mode<synchronous>, transform_indices = @transform_8, window_bounds = array<i64: 1, 64>}, {pipeline_mode = #tpu.pipeline_mode<synchronous>, transform_indices = @transform_9, window_bounds = array<i64: 32, 4>}, {pipeline_mode = #tpu.pipeline_mode<synchronous>, transform_indices = @transform_10, window_bounds = array<i64: 4, 32>}, {transform_indices = @transform_11, window_bounds = array<i64: 2, 64>}]} {
    %c0 = arith.constant 0 : index
    %c0_0 = arith.constant 0 : index
    %c0_1 = arith.constant 0 : index
    %0 = vector.load %arg1[%c0, %c0_0, %c0_1] : memref<2x64x32xbf16, #tpu.memory_space<vmem>>, vector<2x64x32xbf16>
    %1 = arith.extf %0 : vector<2x64x32xbf16> to vector<2x64x32xf32>
    %cst = arith.constant dense<0.000000e+00> : vector<2x32xf32>
    %2 = vector.multi_reduction <add>, %1, %cst [1] : vector<2x64x32xf32> to vector<2x32xf32>
    %cst_2 = arith.constant 6.400000e+01 : f32
    %3 = vector.broadcast %cst_2 : f32 to vector<2x32xf32>
    %4 = arith.divf %2, %3 : vector<2x32xf32>
    %c0_3 = arith.constant 0 : index
    %c0_4 = arith.constant 0 : index
    %5 = vector.load %arg2[%c0_3, %c0_4] : memref<1x32xbf16, #tpu.memory_space<vmem>>, vector<1x32xbf16>
    %6 = arith.extf %5 : vector<1x32xbf16> to vector<1x32xf32>
    %7 = vector.broadcast %6 : vector<1x32xf32> to vector<2x32xf32>
    %8 = arith.addf %4, %7 : vector<2x32xf32>
    %9 = arith.truncf %8 : vector<2x32xf32> to vector<2x32xbf16>
    %c0_5 = arith.constant 0 : index
    %c0_6 = arith.constant 0 : index
    %10 = vector.load %arg3[%c0_5, %c0_6] : memref<64x32xbf16, #tpu.memory_space<vmem>>, vector<64x32xbf16>
    %11 = vector.shape_cast %10 : vector<64x32xbf16> to vector<1x64x32xbf16>
    %12 = vector.broadcast %11 : vector<1x64x32xbf16> to vector<2x64x32xbf16>
    %13 = arith.addf %0, %12 : vector<2x64x32xbf16>
    %14 = vector.shape_cast %13 : vector<2x64x32xbf16> to vector<128x32xbf16>
    %c0_7 = arith.constant 0 : index
    %c0_8 = arith.constant 0 : index
    %15 = vector.load %arg6[%c0_7, %c0_8] : memref<32x64xbf16, #tpu.memory_space<vmem>>, vector<32x64xbf16>
    %cst_9 = arith.constant dense<0.000000e+00> : vector<128x64xf32>
    %16 = tpu.matmul %14, %15, %cst_9 {dimension_numbers = #tpu.dot_dimension_numbers<[1], [0], [0], [1], [0, 0, 1, 1], [], []>} : vector<128x32xbf16>, vector<32x64xbf16>, vector<128x64xf32> -> vector<128x64xf32>
    %c0_10 = arith.constant 0 : index
    %c0_11 = arith.constant 0 : index
    %17 = vector.load %arg7[%c0_10, %c0_11] : memref<1x64xf32, #tpu.memory_space<vmem>>, vector<1x64xf32>
    %18 = vector.broadcast %17 : vector<1x64xf32> to vector<128x64xf32>
    %19 = arith.addf %16, %18 : vector<128x64xf32>
    %20 = vector.extract_strided_slice %19 {offsets = [0, 0], sizes = [128, 32], strides = [1, 1]} : vector<128x64xf32> to vector<128x32xf32>
    %21 = vector.shape_cast %20 : vector<128x32xf32> to vector<2x64x32xf32>
    %22 = vector.extract_strided_slice %19 {offsets = [0, 32], sizes = [128, 32], strides = [1, 1]} : vector<128x64xf32> to vector<128x32xf32>
    %23 = vector.shape_cast %22 : vector<128x32xf32> to vector<2x64x32xf32>
    %c0_12 = arith.constant 0 : index
    %c0_13 = arith.constant 0 : index
    %24 = vector.load %arg4[%c0_12, %c0_13] : memref<32x32xbf16, #tpu.memory_space<vmem>>, vector<32x32xbf16>
    %cst_14 = arith.constant dense<0.000000e+00> : vector<2x32xf32>
    %25 = tpu.matmul %9, %24, %cst_14 {dimension_numbers = #tpu.dot_dimension_numbers<[1], [0], [0], [1], [0, 0, 1, 1], [], []>} : vector<2x32xbf16>, vector<32x32xbf16>, vector<2x32xf32> -> vector<2x32xf32>
    %c0_15 = arith.constant 0 : index
    %c0_16 = arith.constant 0 : index
    %26 = vector.load %arg5[%c0_15, %c0_16] : memref<1x32xf32, #tpu.memory_space<vmem>>, vector<1x32xf32>
    %27 = vector.broadcast %26 : vector<1x32xf32> to vector<2x32xf32>
    %28 = arith.addf %25, %27 : vector<2x32xf32>
    %cst_17 = arith.constant 0.353553385 : f32
    %29 = vector.broadcast %cst_17 : f32 to vector<2x32xf32>
    %30 = arith.mulf %28, %29 : vector<2x32xf32>
    %c0_18 = arith.constant 0 : index
    %c0_19 = arith.constant 0 : index
    %31 = vector.load %arg6[%c0_18, %c0_19] : memref<32x64xbf16, #tpu.memory_space<vmem>>, vector<32x64xbf16>
    %cst_20 = arith.constant dense<0.000000e+00> : vector<2x64xf32>
    %32 = tpu.matmul %9, %31, %cst_20 {dimension_numbers = #tpu.dot_dimension_numbers<[1], [0], [0], [1], [0, 0, 1, 1], [], []>} : vector<2x32xbf16>, vector<32x64xbf16>, vector<2x64xf32> -> vector<2x64xf32>
    %c0_21 = arith.constant 0 : index
    %c0_22 = arith.constant 0 : index
    %33 = vector.load %arg7[%c0_21, %c0_22] : memref<1x64xf32, #tpu.memory_space<vmem>>, vector<1x64xf32>
    %34 = vector.broadcast %33 : vector<1x64xf32> to vector<2x64xf32>
    %35 = arith.addf %32, %34 : vector<2x64xf32>
    %36 = vector.extract_strided_slice %35 {offsets = [0, 0], sizes = [2, 32], strides = [1, 1]} : vector<2x64xf32> to vector<2x32xf32>
    %37 = vector.extract_strided_slice %35 {offsets = [0, 32], sizes = [2, 32], strides = [1, 1]} : vector<2x64xf32> to vector<2x32xf32>
    %38 = vector.shape_cast %30 : vector<2x32xf32> to vector<2x1x32xf32>
    %39 = vector.broadcast %38 : vector<2x1x32xf32> to vector<2x64x32xf32>
    %40 = arith.mulf %21, %39 : vector<2x64x32xf32>
    %41 = arith.truncf %40 : vector<2x64x32xf32> to vector<2x64x32xbf16>
    %42 = vector.shape_cast %41 : vector<2x64x32xbf16> to vector<128x32xbf16>
    %c0_23 = arith.constant 0 : index
    %c0_24 = arith.constant 0 : index
    %43 = vector.load %arg10[%c0_23, %c0_24] : memref<32x4xbf16, #tpu.memory_space<vmem>>, vector<32x4xbf16>
    %cst_25 = arith.constant dense<0.000000e+00> : vector<128x4xf32>
    %44 = tpu.matmul %42, %43, %cst_25 {dimension_numbers = #tpu.dot_dimension_numbers<[1], [0], [0], [1], [0, 0, 1, 1], [], []>} : vector<128x32xbf16>, vector<32x4xbf16>, vector<128x4xf32> -> vector<128x4xf32>
    %45 = vector.shape_cast %44 : vector<128x4xf32> to vector<2x64x4xf32>
    %46 = arith.mulf %36, %30 : vector<2x32xf32>
    %47 = arith.truncf %46 : vector<2x32xf32> to vector<2x32xbf16>
    %c0_26 = arith.constant 0 : index
    %c0_27 = arith.constant 0 : index
    %48 = vector.load %arg10[%c0_26, %c0_27] : memref<32x4xbf16, #tpu.memory_space<vmem>>, vector<32x4xbf16>
    %cst_28 = arith.constant dense<0.000000e+00> : vector<2x4xf32>
    %49 = tpu.matmul %47, %48, %cst_28 {dimension_numbers = #tpu.dot_dimension_numbers<[1], [0], [0], [1], [0, 0, 1, 1], [], []>} : vector<2x32xbf16>, vector<32x4xbf16>, vector<2x4xf32> -> vector<2x4xf32>
    %cst_29 = arith.constant dense<0xFF800000> : vector<2x4xf32>
    %50 = vector.multi_reduction <maximumf>, %45, %cst_29 [1] : vector<2x64x4xf32> to vector<2x4xf32>
    %51 = arith.maximumf %50, %49 : vector<2x4xf32>
    %52 = vector.shape_cast %51 : vector<2x4xf32> to vector<2x1x4xf32>
    %53 = vector.broadcast %52 : vector<2x1x4xf32> to vector<2x64x4xf32>
    %54 = arith.subf %45, %53 : vector<2x64x4xf32>
    %55 = math.exp %54 : vector<2x64x4xf32>
    %56 = arith.subf %49, %51 : vector<2x4xf32>
    %57 = math.exp %56 : vector<2x4xf32>
    %cst_30 = arith.constant dense<0.000000e+00> : vector<2x4xf32>
    %58 = vector.multi_reduction <add>, %55, %cst_30 [1] : vector<2x64x4xf32> to vector<2x4xf32>
    %59 = arith.addf %58, %57 : vector<2x4xf32>
    %cst_31 = arith.constant 1.000000e+00 : f32
    %60 = vector.broadcast %cst_31 : f32 to vector<2x4xf32>
    %61 = arith.divf %60, %59 : vector<2x4xf32>
    %62 = vector.shape_cast %61 : vector<2x4xf32> to vector<2x1x4xf32>
    %63 = vector.broadcast %62 : vector<2x1x4xf32> to vector<2x64x4xf32>
    %64 = arith.mulf %55, %63 : vector<2x64x4xf32>
    %65 = arith.mulf %57, %61 : vector<2x4xf32>
    %66 = vector.shape_cast %64 : vector<2x64x4xf32> to vector<128x4xf32>
    %67 = arith.truncf %66 : vector<128x4xf32> to vector<128x4xbf16>
    %c0_32 = arith.constant 0 : index
    %c0_33 = arith.constant 0 : index
    %68 = vector.load %arg11[%c0_32, %c0_33] : memref<4x32xbf16, #tpu.memory_space<vmem>>, vector<4x32xbf16>
    %cst_34 = arith.constant dense<0.000000e+00> : vector<128x32xf32>
    %69 = tpu.matmul %67, %68, %cst_34 {dimension_numbers = #tpu.dot_dimension_numbers<[1], [0], [0], [1], [0, 0, 1, 1], [], []>} : vector<128x4xbf16>, vector<4x32xbf16>, vector<128x32xf32> -> vector<128x32xf32>
    %70 = vector.shape_cast %69 : vector<128x32xf32> to vector<2x64x32xf32>
    %71 = arith.truncf %65 : vector<2x4xf32> to vector<2x4xbf16>
    %c0_35 = arith.constant 0 : index
    %c0_36 = arith.constant 0 : index
    %72 = vector.load %arg11[%c0_35, %c0_36] : memref<4x32xbf16, #tpu.memory_space<vmem>>, vector<4x32xbf16>
    %cst_37 = arith.constant dense<0.000000e+00> : vector<2x32xf32>
    %73 = tpu.matmul %71, %72, %cst_37 {dimension_numbers = #tpu.dot_dimension_numbers<[1], [0], [0], [1], [0, 0, 1, 1], [], []>} : vector<2x4xbf16>, vector<4x32xbf16>, vector<2x32xf32> -> vector<2x32xf32>
    %74 = arith.mulf %70, %23 : vector<2x64x32xf32>
    %cst_38 = arith.constant dense<0.000000e+00> : vector<2x32xf32>
    %75 = vector.multi_reduction <add>, %74, %cst_38 [1] : vector<2x64x32xf32> to vector<2x32xf32>
    %76 = arith.mulf %73, %37 : vector<2x32xf32>
    %77 = arith.addf %75, %76 : vector<2x32xf32>
    %78 = arith.truncf %77 : vector<2x32xf32> to vector<2x32xbf16>
    %c0_39 = arith.constant 0 : index
    %c0_40 = arith.constant 0 : index
    %79 = vector.load %arg8[%c0_39, %c0_40] : memref<32x64xbf16, #tpu.memory_space<vmem>>, vector<32x64xbf16>
    %cst_41 = arith.constant dense<0.000000e+00> : vector<2x64xf32>
    %80 = tpu.matmul %78, %79, %cst_41 {dimension_numbers = #tpu.dot_dimension_numbers<[1], [0], [0], [1], [0, 0, 1, 1], [], []>} : vector<2x32xbf16>, vector<32x64xbf16>, vector<2x64xf32> -> vector<2x64xf32>
    %c0_42 = arith.constant 0 : index
    %c0_43 = arith.constant 0 : index
    %81 = vector.load %arg9[%c0_42, %c0_43] : memref<1x64xf32, #tpu.memory_space<vmem>>, vector<1x64xf32>
    %82 = vector.broadcast %81 : vector<1x64xf32> to vector<2x64xf32>
    %83 = arith.addf %80, %82 : vector<2x64xf32>
    %c0_44 = arith.constant 0 : index
    %c0_45 = arith.constant 0 : index
    %84 = vector.load %arg12[%c0_44, %c0_45] : memref<2x64xf32, #tpu.memory_space<vmem>>, vector<2x64xf32>
    tpu.vector_store %arg12[%c0_44, %c0_45], %83 {strides = array<i32>} : memref<2x64xf32, #tpu.memory_space<vmem>>, vector<2x64xf32>,
    return
  }
  func.func @transform_0(%arg0: i32) -> (i32, i32, i32) {
    %c0_i32 = arith.constant 0 : i32
    %c0_i32_0 = arith.constant 0 : i32
    %c0_i32_1 = arith.constant 0 : i32
    return %arg0, %c0_i32, %c0_i32_0 : i32, i32, i32
  }
  func.func @transform_1(%arg0: i32) -> (i32, i32) {
    %c0_i32 = arith.constant 0 : i32
    %c0_i32_0 = arith.constant 0 : i32
    %c0_i32_1 = arith.constant 0 : i32
    return %c0_i32, %c0_i32_0 : i32, i32
  }
  func.func @transform_2(%arg0: i32) -> (i32, i32) {
    %c0_i32 = arith.constant 0 : i32
    %c0_i32_0 = arith.constant 0 : i32
    %c0_i32_1 = arith.constant 0 : i32
    return %c0_i32, %c0_i32_0 : i32, i32
  }
  func.func @transform_3(%arg0: i32) -> (i32, i32) {
    %c0_i32 = arith.constant 0 : i32
    %c0_i32_0 = arith.constant 0 : i32
    %c0_i32_1 = arith.constant 0 : i32
    return %c0_i32, %c0_i32_0 : i32, i32
  }
  func.func @transform_4(%arg0: i32) -> (i32, i32) {
    %c0_i32 = arith.constant 0 : i32
    %c0_i32_0 = arith.constant 0 : i32
    %c0_i32_1 = arith.constant 0 : i32
    return %c0_i32, %c0_i32_0 : i32, i32
  }
  func.func @transform_5(%arg0: i32) -> (i32, i32) {
    %c0_i32 = arith.constant 0 : i32
    %c0_i32_0 = arith.constant 0 : i32
    %c0_i32_1 = arith.constant 0 : i32
    return %c0_i32, %c0_i32_0 : i32, i32
  }
  func.func @transform_6(%arg0: i32) -> (i32, i32) {
    %c0_i32 = arith.constant 0 : i32
    %c0_i32_0 = arith.constant 0 : i32
    %c0_i32_1 = arith.constant 0 : i32
    return %c0_i32, %c0_i32_0 : i32, i32
  }
  func.func @transform_7(%arg0: i32) -> (i32, i32) {
    %c0_i32 = arith.constant 0 : i32
    %c0_i32_0 = arith.constant 0 : i32
    %c0_i32_1 = arith.constant 0 : i32
    return %c0_i32, %c0_i32_0 : i32, i32
  }
  func.func @transform_8(%arg0: i32) -> (i32, i32) {
    %c0_i32 = arith.constant 0 : i32
    %c0_i32_0 = arith.constant 0 : i32
    %c0_i32_1 = arith.constant 0 : i32
    return %c0_i32, %c0_i32_0 : i32, i32
  }
  func.func @transform_9(%arg0: i32) -> (i32, i32) {
    %c0_i32 = arith.constant 0 : i32
    %c0_i32_0 = arith.constant 0 : i32
    %c0_i32_1 = arith.constant 0 : i32
    return %c0_i32, %c0_i32_0 : i32, i32
  }
  func.func @transform_10(%arg0: i32) -> (i32, i32) {
    %c0_i32 = arith.constant 0 : i32
    %c0_i32_0 = arith.constant 0 : i32
    %c0_i32_1 = arith.constant 0 : i32
    return %c0_i32, %c0_i32_0 : i32, i32
  }
  func.func @transform_11(%arg0: i32) -> (i32, i32) {
    %c0_i32 = arith.constant 0 : i32
    %c0_i32_0 = arith.constant 0 : i32
    return %arg0, %c0_i32 : i32, i32
  }
}

module attributes {stable_mosaic.version = 11 : i64} {
  func.func @_attnpool_kernel(%arg0: i32, %arg1: memref<2x64x32xbf16, #tpu.memory_space<vmem>>, %arg2: memref<1x32xbf16, #tpu.memory_space<vmem>>, %arg3: memref<64x32xbf16, #tpu.memory_space<vmem>>, %arg4: memref<32x32xbf16, #tpu.memory_space<vmem>>, %arg5: memref<1x32xf32, #tpu.memory_space<vmem>>, %arg6: memref<32x64xbf16, #tpu.memory_space<vmem>>, %arg7: memref<1x64xf32, #tpu.memory_space<vmem>>, %arg8: memref<32x64xbf16, #tpu.memory_space<vmem>>, %arg9: memref<1x64xf32, #tpu.memory_space<vmem>>, %arg10: memref<32x4xbf16, #tpu.memory_space<vmem>>, %arg11: memref<4x32xbf16, #tpu.memory_space<vmem>>, %arg12: memref<2x64xf32, #tpu.memory_space<vmem>>) attributes {dimension_semantics = [#tpu.dimension_semantics<parallel>], iteration_bounds = array<i64: 1>, scalar_prefetch = 0 : i64, scratch_operands = 0 : i64, tpu.core_type = #tpu.core_type<tc>, window_params = [{transform_indices = @transform_0, window_bounds = array<i64: 2, 64, 32>}, {pipeline_mode = #tpu.pipeline_mode<synchronous>, transform_indices = @transform_1, window_bounds = array<i64: 1, 32>}, {pipeline_mode = #tpu.pipeline_mode<synchronous>, transform_indices = @transform_2, window_bounds = array<i64: 64, 32>}, {pipeline_mode = #tpu.pipeline_mode<synchronous>, transform_indices = @transform_3, window_bounds = array<i64: 32, 32>}, {pipeline_mode = #tpu.pipeline_mode<synchronous>, transform_indices = @transform_4, window_bounds = array<i64: 1, 32>}, {pipeline_mode = #tpu.pipeline_mode<synchronous>, transform_indices = @transform_5, window_bounds = array<i64: 32, 64>}, {pipeline_mode = #tpu.pipeline_mode<synchronous>, transform_indices = @transform_6, window_bounds = array<i64: 1, 64>}, {pipeline_mode = #tpu.pipeline_mode<synchronous>, transform_indices = @transform_7, window_bounds = array<i64: 32, 64>}, {pipeline_mode = #tpu.pipeline_mode<synchronous>, transform_indices = @transform_8, window_bounds = array<i64: 1, 64>}, {pipeline_mode = #tpu.pipeline_mode<synchronous>, transform_indices = @transform_9, window_bounds = array<i64: 32, 4>}, {pipeline_mode = #tpu.pipeline_mode<synchronous>, transform_indices = @transform_10, window_bounds = array<i64: 4, 32>}, {transform_indices = @transform_11, window_bounds = array<i64: 2, 64>}]} {
    %c0 = arith.constant 0 : index
    %c0_0 = arith.constant 0 : index
    %c0_1 = arith.constant 0 : index
    %0 = vector.load %arg1[%c0, %c0_0, %c0_1] : memref<2x64x32xbf16, #tpu.memory_space<vmem>>, vector<2x64x32xbf16>
    %1 = arith.extf %0 : vector<2x64x32xbf16> to vector<2x64x32xf32>
    %cst = arith.constant dense<0.000000e+00> : vector<2x32xf32>
    %2 = vector.multi_reduction <add>, %1, %cst [1] : vector<2x64x32xf32> to vector<2x32xf32>
    %cst_2 = arith.constant 6.400000e+01 : f32
    %3 = vector.broadcast %cst_2 : f32 to vector<2x32xf32>
    %4 = arith.divf %2, %3 : vector<2x32xf32>
    %c0_3 = arith.constant 0 : index
    %c0_4 = arith.constant 0 : index
    %5 = vector.load %arg2[%c0_3, %c0_4] : memref<1x32xbf16, #tpu.memory_space<vmem>>, vector<1x32xbf16>
    %6 = arith.extf %5 : vector<1x32xbf16> to vector<1x32xf32>
    %7 = vector.broadcast %6 : vector<1x32xf32> to vector<2x32xf32>
    %8 = arith.addf %4, %7 : vector<2x32xf32>
    %9 = arith.truncf %8 : vector<2x32xf32> to vector<2x32xbf16>
    %c0_5 = arith.constant 0 : index
    %c0_6 = arith.constant 0 : index
    %10 = vector.load %arg3[%c0_5, %c0_6] : memref<64x32xbf16, #tpu.memory_space<vmem>>, vector<64x32xbf16>
    %11 = vector.shape_cast %10 : vector<64x32xbf16> to vector<1x64x32xbf16>
    %12 = vector.broadcast %11 : vector<1x64x32xbf16> to vector<2x64x32xbf16>
    %13 = arith.addf %0, %12 : vector<2x64x32xbf16>
    %14 = vector.shape_cast %13 : vector<2x64x32xbf16> to vector<128x32xbf16>
    %c0_7 = arith.constant 0 : index
    %c0_8 = arith.constant 0 : index
    %15 = vector.load %arg6[%c0_7, %c0_8] : memref<32x64xbf16, #tpu.memory_space<vmem>>, vector<32x64xbf16>
    %cst_9 = arith.constant dense<0.000000e+00> : vector<128x64xf32>
    %16 = tpu.matmul %14, %15, %cst_9 {dimension_numbers = #tpu.dot_dimension_numbers<[1], [0], [0], [1], [0, 0, 1, 1], [], []>} : vector<128x32xbf16>, vector<32x64xbf16>, vector<128x64xf32> -> vector<128x64xf32>
    %c0_10 = arith.constant 0 : index
    %c0_11 = arith.constant 0 : index
    %17 = vector.load %arg7[%c0_10, %c0_11] : memref<1x64xf32, #tpu.memory_space<vmem>>, vector<1x64xf32>
    %18 = vector.broadcast %17 : vector<1x64xf32> to vector<128x64xf32>
    %19 = arith.addf %16, %18 : vector<128x64xf32>
    %20 = vector.extract_strided_slice %19 {offsets = [0, 0], sizes = [128, 32], strides = [1, 1]} : vector<128x64xf32> to vector<128x32xf32>
    %21 = vector.shape_cast %20 : vector<128x32xf32> to vector<2x64x32xf32>
    %22 = vector.extract_strided_slice %19 {offsets = [0, 32], sizes = [128, 32], strides = [1, 1]} : vector<128x64xf32> to vector<128x32xf32>
    %23 = vector.shape_cast %22 : vector<128x32xf32> to vector<2x64x32xf32>
    %c0_12 = arith.constant 0 : index
    %c0_13 = arith.constant 0 : index
    %24 = vector.load %arg4[%c0_12, %c0_13] : memref<32x32xbf16, #tpu.memory_space<vmem>>, vector<32x32xbf16>
    %cst_14 = arith.constant dense<0.000000e+00> : vector<2x32xf32>
    %25 = tpu.matmul %9, %24, %cst_14 {dimension_numbers = #tpu.dot_dimension_numbers<[1], [0], [0], [1], [0, 0, 1, 1], [], []>} : vector<2x32xbf16>, vector<32x32xbf16>, vector<2x32xf32> -> vector<2x32xf32>
    %c0_15 = arith.constant 0 : index
    %c0_16 = arith.constant 0 : index
    %26 = vector.load %arg5[%c0_15, %c0_16] : memref<1x32xf32, #tpu.memory_space<vmem>>, vector<1x32xf32>
    %27 = vector.broadcast %26 : vector<1x32xf32> to vector<2x32xf32>
    %28 = arith.addf %25, %27 : vector<2x32xf32>
    %cst_17 = arith.constant 0.353553385 : f32
    %29 = vector.broadcast %cst_17 : f32 to vector<2x32xf32>
    %30 = arith.mulf %28, %29 : vector<2x32xf32>
    %c0_18 = arith.constant 0 : index
    %c0_19 = arith.constant 0 : index
    %31 = vector.load %arg6[%c0_18, %c0_19] : memref<32x64xbf16, #tpu.memory_space<vmem>>, vector<32x64xbf16>
    %cst_20 = arith.constant dense<0.000000e+00> : vector<2x64xf32>
    %32 = tpu.matmul %9, %31, %cst_20 {dimension_numbers = #tpu.dot_dimension_numbers<[1], [0], [0], [1], [0, 0, 1, 1], [], []>} : vector<2x32xbf16>, vector<32x64xbf16>, vector<2x64xf32> -> vector<2x64xf32>
    %c0_21 = arith.constant 0 : index
    %c0_22 = arith.constant 0 : index
    %33 = vector.load %arg7[%c0_21, %c0_22] : memref<1x64xf32, #tpu.memory_space<vmem>>, vector<1x64xf32>
    %34 = vector.broadcast %33 : vector<1x64xf32> to vector<2x64xf32>
    %35 = arith.addf %32, %34 : vector<2x64xf32>
    %36 = vector.extract_strided_slice %35 {offsets = [0, 0], sizes = [2, 32], strides = [1, 1]} : vector<2x64xf32> to vector<2x32xf32>
    %37 = vector.extract_strided_slice %35 {offsets = [0, 32], sizes = [2, 32], strides = [1, 1]} : vector<2x64xf32> to vector<2x32xf32>
    %38 = vector.shape_cast %30 : vector<2x32xf32> to vector<2x1x32xf32>
    %39 = vector.broadcast %38 : vector<2x1x32xf32> to vector<2x64x32xf32>
    %40 = arith.mulf %21, %39 : vector<2x64x32xf32>
    %41 = arith.truncf %40 : vector<2x64x32xf32> to vector<2x64x32xbf16>
    %42 = vector.shape_cast %41 : vector<2x64x32xbf16> to vector<128x32xbf16>
    %c0_23 = arith.constant 0 : index
    %c0_24 = arith.constant 0 : index
    %43 = vector.load %arg10[%c0_23, %c0_24] : memref<32x4xbf16, #tpu.memory_space<vmem>>, vector<32x4xbf16>
    %cst_25 = arith.constant dense<0.000000e+00> : vector<128x4xf32>
    %44 = tpu.matmul %42, %43, %cst_25 {dimension_numbers = #tpu.dot_dimension_numbers<[1], [0], [0], [1], [0, 0, 1, 1], [], []>} : vector<128x32xbf16>, vector<32x4xbf16>, vector<128x4xf32> -> vector<128x4xf32>
    %45 = vector.shape_cast %44 : vector<128x4xf32> to vector<2x64x4xf32>
    %46 = arith.mulf %36, %30 : vector<2x32xf32>
    %47 = arith.truncf %46 : vector<2x32xf32> to vector<2x32xbf16>
    %c0_26 = arith.constant 0 : index
    %c0_27 = arith.constant 0 : index
    %48 = vector.load %arg10[%c0_26, %c0_27] : memref<32x4xbf16, #tpu.memory_space<vmem>>, vector<32x4xbf16>
    %cst_28 = arith.constant dense<0.000000e+00> : vector<2x4xf32>
    %49 = tpu.matmul %47, %48, %cst_28 {dimension_numbers = #tpu.dot_dimension_numbers<[1], [0], [0], [1], [0, 0, 1, 1], [], []>} : vector<2x32xbf16>, vector<32x4xbf16>, vector<2x4xf32> -> vector<2x4xf32>
    %cst_29 = arith.constant dense<0xFF800000> : vector<2x4xf32>
    %50 = vector.multi_reduction <maximumf>, %45, %cst_29 [1] : vector<2x64x4xf32> to vector<2x4xf32>
    %51 = arith.maximumf %50, %49 : vector<2x4xf32>
    %52 = vector.shape_cast %51 : vector<2x4xf32> to vector<2x1x4xf32>
    %53 = vector.broadcast %52 : vector<2x1x4xf32> to vector<2x64x4xf32>
    %54 = arith.subf %45, %53 : vector<2x64x4xf32>
    %55 = math.exp %54 : vector<2x64x4xf32>
    %56 = arith.subf %49, %51 : vector<2x4xf32>
    %57 = math.exp %56 : vector<2x4xf32>
    %cst_30 = arith.constant dense<0.000000e+00> : vector<2x4xf32>
    %58 = vector.multi_reduction <add>, %55, %cst_30 [1] : vector<2x64x4xf32> to vector<2x4xf32>
    %59 = arith.addf %58, %57 : vector<2x4xf32>
    %cst_31 = arith.constant 1.000000e+00 : f32
    %60 = vector.broadcast %cst_31 : f32 to vector<2x4xf32>
    %61 = arith.divf %60, %59 : vector<2x4xf32>
    %62 = vector.shape_cast %61 : vector<2x4xf32> to vector<2x1x4xf32>
    %63 = vector.broadcast %62 : vector<2x1x4xf32> to vector<2x64x4xf32>
    %64 = arith.mulf %55, %63 : vector<2x64x4xf32>
    %65 = arith.mulf %57, %61 : vector<2x4xf32>
    %66 = vector.shape_cast %64 : vector<2x64x4xf32> to vector<128x4xf32>
    %67 = arith.truncf %66 : vector<128x4xf32> to vector<128x4xbf16>
    %c0_32 = arith.constant 0 : index
    %c0_33 = arith.constant 0 : index
    %68 = vector.load %arg11[%c0_32, %c0_33] : memref<4x32xbf16, #tpu.memory_space<vmem>>, vector<4x32xbf16>
    %cst_34 = arith.constant dense<0.000000e+00> : vector<128x32xf32>
    %69 = tpu.matmul %67, %68, %cst_34 {dimension_numbers = #tpu.dot_dimension_numbers<[1], [0], [0], [1], [0, 0, 1, 1], [], []>} : vector<128x4xbf16>, vector<4x32xbf16>, vector<128x32xf32> -> vector<128x32xf32>
    %70 = vector.shape_cast %69 : vector<128x32xf32> to vector<2x64x32xf32>
    %71 = arith.truncf %65 : vector<2x4xf32> to vector<2x4xbf16>
    %c0_35 = arith.constant 0 : index
    %c0_36 = arith.constant 0 : index
    %72 = vector.load %arg11[%c0_35, %c0_36] : memref<4x32xbf16, #tpu.memory_space<vmem>>, vector<4x32xbf16>
    %cst_37 = arith.constant dense<0.000000e+00> : vector<2x32xf32>
    %73 = tpu.matmul %71, %72, %cst_37 {dimension_numbers = #tpu.dot_dimension_numbers<[1], [0], [0], [1], [0, 0, 1, 1], [], []>} : vector<2x4xbf16>, vector<4x32xbf16>, vector<2x32xf32> -> vector<2x32xf32>
    %74 = arith.mulf %70, %23 : vector<2x64x32xf32>
    %cst_38 = arith.constant dense<0.000000e+00> : vector<2x32xf32>
    %75 = vector.multi_reduction <add>, %74, %cst_38 [1] : vector<2x64x32xf32> to vector<2x32xf32>
    %76 = arith.mulf %73, %37 : vector<2x32xf32>
    %77 = arith.addf %75, %76 : vector<2x32xf32>
    %78 = arith.truncf %77 : vector<2x32xf32> to vector<2x32xbf16>
    %c0_39 = arith.constant 0 : index
    %c0_40 = arith.constant 0 : index
    %79 = vector.load %arg8[%c0_39, %c0_40] : memref<32x64xbf16, #tpu.memory_space<vmem>>, vector<32x64xbf16>
    %cst_41 = arith.constant dense<0.000000e+00> : vector<2x64xf32>
    %80 = tpu.matmul %78, %79, %cst_41 {dimension_numbers = #tpu.dot_dimension_numbers<[1], [0], [0], [1], [0, 0, 1, 1], [], []>} : vector<2x32xbf16>, vector<32x64xbf16>, vector<2x64xf32> -> vector<2x64xf32>
    %c0_42 = arith.constant 0 : index
    %c0_43 = arith.constant 0 : index
    %81 = vector.load %arg9[%c0_42, %c0_43] : memref<1x64xf32, #tpu.memory_space<vmem>>, vector<1x64xf32>
    %82 = vector.broadcast %81 : vector<1x64xf32> to vector<2x64xf32>
    %83 = arith.addf %80, %82 : vector<2x64xf32>
    %c0_44 = arith.constant 0 : index
    %c0_45 = arith.constant 0 : index
    %84 = vector.load %arg12[%c0_44, %c0_45] : memref<2x64xf32, #tpu.memory_space<vmem>>, vector<2x64xf32>
    tpu.vector_store %arg12[%c0_44, %c0_45], %83 {strides = array<i32>} : memref<2x64xf32, #tpu.memory_space<vmem>>, vector<2x64xf32>,
    return
  }
  func.func @transform_0(%arg0: i32) -> (i32, i32, i32) {
    %c0_i32 = arith.constant 0 : i32
    %c0_i32_0 = arith.constant 0 : i32
    %c0_i32_1 = arith.constant 0 : i32
    return %arg0, %c0_i32, %c0_i32_0 : i32, i32, i32
  }
  func.func @transform_1(%arg0: i32) -> (i32, i32) {
    %c0_i32 = arith.constant 0 : i32
    %c0_i32_0 = arith.constant 0 : i32
    %c0_i32_1 = arith.constant 0 : i32
    return %c0_i32, %c0_i32_0 : i32, i32
  }
  func.func @transform_2(%arg0: i32) -> (i32, i32) {
    %c0_i32 = arith.constant 0 : i32
    %c0_i32_0 = arith.constant 0 : i32
    %c0_i32_1 = arith.constant 0 : i32
    return %c0_i32, %c0_i32_0 : i32, i32
  }
  func.func @transform_3(%arg0: i32) -> (i32, i32) {
    %c0_i32 = arith.constant 0 : i32
    %c0_i32_0 = arith.constant 0 : i32
    %c0_i32_1 = arith.constant 0 : i32
    return %c0_i32, %c0_i32_0 : i32, i32
  }
  func.func @transform_4(%arg0: i32) -> (i32, i32) {
    %c0_i32 = arith.constant 0 : i32
    %c0_i32_0 = arith.constant 0 : i32
    %c0_i32_1 = arith.constant 0 : i32
    return %c0_i32, %c0_i32_0 : i32, i32
  }
  func.func @transform_5(%arg0: i32) -> (i32, i32) {
    %c0_i32 = arith.constant 0 : i32
    %c0_i32_0 = arith.constant 0 : i32
    %c0_i32_1 = arith.constant 0 : i32
    return %c0_i32, %c0_i32_0 : i32, i32
  }
  func.func @transform_6(%arg0: i32) -> (i32, i32) {
    %c0_i32 = arith.constant 0 : i32
    %c0_i32_0 = arith.constant 0 : i32
    %c0_i32_1 = arith.constant 0 : i32
    return %c0_i32, %c0_i32_0 : i32, i32
  }
  func.func @transform_7(%arg0: i32) -> (i32, i32) {
    %c0_i32 = arith.constant 0 : i32
    %c0_i32_0 = arith.constant 0 : i32
    %c0_i32_1 = arith.constant 0 : i32
    return %c0_i32, %c0_i32_0 : i32, i32
  }
  func.func @transform_8(%arg0: i32) -> (i32, i32) {
    %c0_i32 = arith.constant 0 : i32
    %c0_i32_0 = arith.constant 0 : i32
    %c0_i32_1 = arith.constant 0 : i32
    return %c0_i32, %c0_i32_0 : i32, i32
  }
  func.func @transform_9(%arg0: i32) -> (i32, i32) {
    %c0_i32 = arith.constant 0 : i32
    %c0_i32_0 = arith.constant 0 : i32
    %c0_i32_1 = arith.constant 0 : i32
    return %c0_i32, %c0_i32_0 : i32, i32
  }
  func.func @transform_10(%arg0: i32) -> (i32, i32) {
    %c0_i32 = arith.constant 0 : i32
    %c0_i32_0 = arith.constant 0 : i32
    %c0_i32_1 = arith.constant 0 : i32
    return %c0_i32, %c0_i32_0 : i32, i32
  }
  func.func @transform_11(%arg0: i32) -> (i32, i32) {
    %c0_i32 = arith.constant 0 : i32
    %c0_i32_0 = arith.constant 0 : i32
    return %arg0, %c0_i32 : i32, i32
  }
}

</mosaic_0001>

<llo_original>
// kernel: tpu_custom_call.1
$region0: #{tpu_custom_call.1}
  #allocation0 [shape = 'u32[]', space=smem, size = 0x4, offset = 0x4, fixed_abs, tag = 'smem constant byte address 0x4 - core index']
  #allocation1 [shape = 'u32[144,128]{1,0:T(1,128)}', space=vmem, size = 0x12000, scoped, tag = 'internal scratch']
  %s0 = inlined_call_operand.vmem [shape: bf16[2,64,32], index: 0, kind: input, shape index: {}]
  %s1 = inlined_call_operand.vmem [shape: bf16[1,32], index: 1, kind: input, shape index: {}]
  %s2 = inlined_call_operand.vmem [shape: bf16[64,32], index: 2, kind: input, shape index: {}]
  %s3 = inlined_call_operand.vmem [shape: bf16[32,32], index: 3, kind: input, shape index: {}]
  %s4 = inlined_call_operand.vmem [shape: f32[1,32], index: 4, kind: input, shape index: {}]
  %s5 = inlined_call_operand.vmem [shape: bf16[32,64], index: 5, kind: input, shape index: {}]
  %s6 = inlined_call_operand.vmem [shape: f32[1,64], index: 6, kind: input, shape index: {}]
  %s7 = inlined_call_operand.vmem [shape: bf16[32,64], index: 7, kind: input, shape index: {}]
  %s8 = inlined_call_operand.vmem [shape: f32[1,64], index: 8, kind: input, shape index: {}]
  %s9 = inlined_call_operand.vmem [shape: bf16[32,4], index: 9, kind: input, shape index: {}]
  %s10 = inlined_call_operand.vmem [shape: bf16[4,32], index: 10, kind: input, shape index: {}]
  %s11 = inlined_call_operand.hbm [shape: f32[2,64], index: 11, kind: output, shape index: {}]
  %s12 = sld [smem:[#allocation0]]
  $region54: #{tpu_custom_call.1} parent=0
    _
  %s14 = ssub.s32 1, %s12
  %s15 = scalar_select 0, %s14, %s12
  $region1: #{tpu_custom_call.1} parent=0
    #allocation2 [shape = 'u8[1024]{0}', space=vmem, size = 0x400, scoped, tag = 'output window, operand 0, single buffered']
    #allocation3 [shape = 's32[1]{0}', space=sflag, size = 0x4, scoped, tag = 'scoped memory for tpu_custom_call.1']
    %16 = vsyncpa [#allocation3], 0
    // Predicated region
    $region2: #{tpu_custom_call.1} parent=1 // pred_check
      _
    $region3: #{tpu_custom_call.1} parent=1 // pred_check_branch
      %18 = sbr.rel (0) target = $region5
    $region4: #{tpu_custom_call.1} parent=1 // pred_region
      _
    $region5: #{tpu_custom_call.1} parent=1 // pred_fallthru
      _
    // Predicated region
    $region6: #{tpu_custom_call.1} parent=1 // pred_check
      _
    $region7: #{tpu_custom_call.1} parent=1 // pred_check_branch
      %20 = sbr.rel (0) target = $region9
    $region8: #{tpu_custom_call.1} parent=1 // pred_region
      _
    $region9: #{tpu_custom_call.1} parent=1 // pred_fallthru
      _
    // Predicated region
    $region10: #{tpu_custom_call.1} parent=1 // pred_check
      _
    $region11: #{tpu_custom_call.1} parent=1 // pred_check_branch
      %22 = sbr.rel (0) target = $region13
    $region12: #{tpu_custom_call.1} parent=1 // pred_region
      _
    $region13: #{tpu_custom_call.1} parent=1 // pred_fallthru
      _
    // Predicated region
    $region14: #{tpu_custom_call.1} parent=1 // pred_check
      _
    $region15: #{tpu_custom_call.1} parent=1 // pred_check_branch
      %24 = sbr.rel (0) target = $region17
    $region16: #{tpu_custom_call.1} parent=1 // pred_region
      _
    $region17: #{tpu_custom_call.1} parent=1 // pred_fallthru
      _
    // Predicated region
    $region18: #{tpu_custom_call.1} parent=1 // pred_check
      _
    $region19: #{tpu_custom_call.1} parent=1 // pred_check_branch
      %26 = sbr.rel (0) target = $region21
    $region20: #{tpu_custom_call.1} parent=1 // pred_region
      _
    $region21: #{tpu_custom_call.1} parent=1 // pred_fallthru
      _
    // Predicated region
    $region22: #{tpu_custom_call.1} parent=1 // pred_check
      _
    $region23: #{tpu_custom_call.1} parent=1 // pred_check_branch
      %28 = sbr.rel (0) target = $region25
    $region24: #{tpu_custom_call.1} parent=1 // pred_region
      _
    $region25: #{tpu_custom_call.1} parent=1 // pred_fallthru
      _
    // Predicated region
    $region26: #{tpu_custom_call.1} parent=1 // pred_check
      _
    $region27: #{tpu_custom_call.1} parent=1 // pred_check_branch
      %30 = sbr.rel (0) target = $region29
    $region28: #{tpu_custom_call.1} parent=1 // pred_region
      _
    $region29: #{tpu_custom_call.1} parent=1 // pred_fallthru
      _
    // Predicated region
    $region30: #{tpu_custom_call.1} parent=1 // pred_check
      _
    $region31: #{tpu_custom_call.1} parent=1 // pred_check_branch
      %32 = sbr.rel (0) target = $region33
    $region32: #{tpu_custom_call.1} parent=1 // pred_region
      _
    $region33: #{tpu_custom_call.1} parent=1 // pred_fallthru
      _
    // Predicated region
    $region34: #{tpu_custom_call.1} parent=1 // pred_check
      _
    $region35: #{tpu_custom_call.1} parent=1 // pred_check_branch
      %34 = sbr.rel (0) target = $region37
    $region36: #{tpu_custom_call.1} parent=1 // pred_region
      _
    $region37: #{tpu_custom_call.1} parent=1 // pred_fallthru
      _
    // Predicated region
    $region38: #{tpu_custom_call.1} parent=1 // pred_check
      _
    $region39: #{tpu_custom_call.1} parent=1 // pred_check_branch
      %36 = sbr.rel (0) target = $region41
    $region40: #{tpu_custom_call.1} parent=1 // pred_region
      _
    $region41: #{tpu_custom_call.1} parent=1 // pred_fallthru
      _
    // Predicated region
    $region42: #{tpu_custom_call.1} parent=1 // pred_check
      _
    $region43: #{tpu_custom_call.1} parent=1 // pred_check_branch
      %38 = sbr.rel (0) target = $region45
    $region44: #{tpu_custom_call.1} parent=1 // pred_region
      _
    $region45: #{tpu_custom_call.1} parent=1 // pred_fallthru
      _
    %v40 = vld [vmem:[%s0] sm:$0xf]
    %v41 = vld [vmem:[%s0 + $0x4] sm:$0xf]
    %v42 = vld [vmem:[%s0 + $0x8] sm:$0xf]
    %v43 = vld [vmem:[%s0 + $0xc] sm:$0xf]
    %v44 = vld [vmem:[%s0 + $0x10] sm:$0xf]
    %v45 = vld [vmem:[%s0 + $0x14] sm:$0xf]
    %v46 = vld [vmem:[%s0 + $0x18] sm:$0xf]
    %v47 = vld [vmem:[%s0 + $0x1c] sm:$0xf]
    %v48 = vld [vmem:[%s0 + $0x20] sm:$0xf]
    %v49 = vld [vmem:[%s0 + $0x24] sm:$0xf]
    %v50 = vld [vmem:[%s0 + $0x28] sm:$0xf]
    %v51 = vld [vmem:[%s0 + $0x2c] sm:$0xf]
    %v52 = vld [vmem:[%s0 + $0x30] sm:$0xf]
    %v53 = vld [vmem:[%s0 + $0x34] sm:$0xf]
    %v54 = vld [vmem:[%s0 + $0x38] sm:$0xf]
    %v55 = vld [vmem:[%s0 + $0x3c] sm:$0xf]
    %v56 = vunpack.c.l.bf16 %v40
    %v57 = vunpack.c.l.bf16 %v41
    %v58 = vunpack.c.l.bf16 %v42
    %v59 = vunpack.c.l.bf16 %v43
    %v60 = vunpack.c.l.bf16 %v44
    %v61 = vunpack.c.l.bf16 %v45
    %v62 = vunpack.c.l.bf16 %v46
    %v63 = vunpack.c.l.bf16 %v47
    %v64 = vunpack.c.l.bf16 %v48
    %v65 = vunpack.c.l.bf16 %v49
    %v66 = vunpack.c.l.bf16 %v50
    %v67 = vunpack.c.l.bf16 %v51
    %v68 = vunpack.c.l.bf16 %v52
    %v69 = vunpack.c.l.bf16 %v53
    %v70 = vunpack.c.l.bf16 %v54
    %v71 = vunpack.c.l.bf16 %v55
    %vm72 = vcmask 261120
    %v73 = vsel %vm72, %v56, 0.0
    %v74 = vsel %vm72, %v57, 0.0
    %v75 = vadd.f32 %v73, %v74
    %v76 = vsel %vm72, %v58, 0.0
    %v77 = vadd.f32 %v75, %v76
    %v78 = vsel %vm72, %v59, 0.0
    %v79 = vadd.f32 %v77, %v78
    %v80 = vsel %vm72, %v60, 0.0
    %v81 = vadd.f32 %v79, %v80
    %v82 = vsel %vm72, %v61, 0.0
    %v83 = vadd.f32 %v81, %v82
    %v84 = vsel %vm72, %v62, 0.0
    %v85 = vadd.f32 %v83, %v84
    %v86 = vsel %vm72, %v63, 0.0
    %v87 = vadd.f32 %v85, %v86
    %v88 = vrot.slane %v87, 4
    %v89 = vadd.f32 %v87, %v88
    %v90 = vrot.slane %v89, 2
    %v91 = vadd.f32 %v89, %v90
    %v92 = vrot.slane %v91, 1
    %v93 = vadd.f32 %v91, %v92
    %v94 = vsel %vm72, %v64, 0.0
    %v95 = vsel %vm72, %v65, 0.0
    %v96 = vadd.f32 %v94, %v95
    %v97 = vsel %vm72, %v66, 0.0
    %v98 = vadd.f32 %v96, %v97
    %v99 = vsel %vm72, %v67, 0.0
    %v100 = vadd.f32 %v98, %v99
    %v101 = vsel %vm72, %v68, 0.0
    %v102 = vadd.f32 %v100, %v101
    %v103 = vsel %vm72, %v69, 0.0
    %v104 = vadd.f32 %v102, %v103
    %v105 = vsel %vm72, %v70, 0.0
    %v106 = vadd.f32 %v104, %v105
    %v107 = vsel %vm72, %v71, 0.0
    %v108 = vadd.f32 %v106, %v107
    %v109 = vrot.slane %v108, 4
    %v110 = vadd.f32 %v108, %v109
    %v111 = vrot.slane %v110, 2
    %v112 = vadd.f32 %v110, %v111
    %v113 = vrot.slane %v112, 1
    %v114 = vadd.f32 %v112, %v113
    %v115 = vrcp.pop 64.0
    %v116 = vmul.f32 %v93, %v115
    %v117 = vmul.f32 %v114, %v115
    %v118 = vld [vmem:[%s1] sm:$0x1]
    %v119 = vunpack.c.l.bf16 %v118
    %v120 = vlaneseq
    %v121 = vshrl.u32 %v120, 7
    %v122 = vsub.s32 0, %v121
    %v123 = vrot.slane %v119, %v122
    %v124 = vadd.f32 %v116, %v123
    %v125 = vadd.f32 %v117, %v123
    %v126 = vpack.c.bf16 %v124, %v124
    %v127 = vpack.c.bf16 %v125, %v125
    %v128 = vld [vmem:[%s2] sm:$0xf]
    %v129 = vld [vmem:[%s2 + $0x4] sm:$0xf]
    %v130 = vld [vmem:[%s2 + $0x8] sm:$0xf]
    %v131 = vld [vmem:[%s2 + $0xc] sm:$0xf]
    %v132 = vld [vmem:[%s2 + $0x10] sm:$0xf]
    %v133 = vld [vmem:[%s2 + $0x14] sm:$0xf]
    %v134 = vld [vmem:[%s2 + $0x18] sm:$0xf]
    %v135 = vld [vmem:[%s2 + $0x1c] sm:$0xf]
    %v136 = vadd.bf16 %v40, %v128
    %v137 = vadd.bf16 %v41, %v129
    %v138 = vadd.bf16 %v42, %v130
    %v139 = vadd.bf16 %v43, %v131
    %v140 = vadd.bf16 %v44, %v132
    %v141 = vadd.bf16 %v45, %v133
    %v142 = vadd.bf16 %v46, %v134
    %v143 = vadd.bf16 %v47, %v135
    %v144 = vadd.bf16 %v48, %v128
    %v145 = vadd.bf16 %v49, %v129
    %v146 = vadd.bf16 %v50, %v130
    %v147 = vadd.bf16 %v51, %v131
    %v148 = vadd.bf16 %v52, %v132
    %v149 = vadd.bf16 %v53, %v133
    %v150 = vadd.bf16 %v54, %v134
    %v151 = vadd.bf16 %v55, %v135
    %v152 = vld [vmem:[%s5] sm:$0xf]
    %v153 = vld [vmem:[%s5 + $0x4] sm:$0xf]
    %v154 = vld [vmem:[%s5 + $0x8] sm:$0xf]
    %v155 = vld [vmem:[%s5 + $0xc] sm:$0xf]
    %v156 = vld [vmem:[%s6] sm:$0x1]
    %v158 = vlaneseq
    %v159 = vshrl.u32 %v158, 7
    %v160 = vsub.s32 0, %v159
    %v161 = vrot.slane %v156, %v160
    %v179 = vunpack.c.l.b16 %v136
    %v180 = vunpack.c.l.b16 %v137
    %v181 = vunpack.c.l.b16 %v138
    %v182 = vunpack.c.l.b16 %v139
    %v183 = vunpack.c.l.b16 %v140
    %v184 = vunpack.c.l.b16 %v141
    %v185 = vunpack.c.l.b16 %v142
    %v186 = vunpack.c.l.b16 %v143
    %v187 = vunpack.c.l.b16 %v144
    %v188 = vunpack.c.l.b16 %v145
    %v189 = vunpack.c.l.b16 %v146
    %v190 = vunpack.c.l.b16 %v147
    %v191 = vunpack.c.l.b16 %v148
    %v192 = vunpack.c.l.b16 %v149
    %v193 = vunpack.c.l.b16 %v150
    %v194 = vunpack.c.l.b16 %v151
    %v195 = vpack.c.b16 %v180, %v179
    %v196 = vpack.c.b16 %v182, %v181
    %v197 = vpack.c.b16 %v184, %v183
    %v198 = vpack.c.b16 %v186, %v185
    %v199 = vpack.c.b16 %v188, %v187
    %v200 = vpack.c.b16 %v190, %v189
    %v201 = vpack.c.b16 %v192, %v191
    %v202 = vpack.c.b16 %v194, %v193
    %v207 = vunpack.c.l.b16 %v152
    %v208 = vunpack.c.l.b16 %v153
    %v209 = vunpack.c.l.b16 %v154
    %v210 = vunpack.c.l.b16 %v155
    %v211 = vpack.c.b16 %v208, %v207
    %v212 = vpack.c.b16 %v210, %v209
    %v216 = vsel %vm72, %v195, 0
    %v219 = vsel %vm72, %v196, 0
    %v222 = vsel %vm72, %v197, 0
    %v225 = vsel %vm72, %v198, 0
    %v228 = vsel %vm72, %v199, 0
    %v231 = vsel %vm72, %v200, 0
    %v234 = vsel %vm72, %v201, 0
    %v237 = vsel %vm72, %v202, 0
    %239 = vmatprep.subr.bf16.mxu0 0
    %240 = vmatpush1.bf16.msra.mxu0 0
    %241 = vmatprep.subr.bf16.mxu0 0
    %242 = vmatpush1.bf16.msra.mxu0 0
    %243 = vmatprep.subr.bf16.mxu0 0
    %244 = vmatpush1.bf16.msra.mxu0 0
    %245 = vmatprep.subr.bf16.mxu0 0
    %246 = vmatpush1.bf16.msra.mxu0 0
    %247 = vmatprep.subr.bf16.mxu0 0
    %248 = vmatpush1.bf16.msra.mxu0 0
    %249 = vmatprep.subr.bf16.mxu0 0
    %250 = vmatpush1.bf16.msra.mxu0 0
    %251 = vmatprep.subr.bf16.mxu0 0
    %252 = vmatpush1.bf16.msra.mxu0 %v212
    %253 = vmatprep.subr.bf16.mxu0 0
    %254 = vmatpush1.bf16.msra.mxu0 %v211
    %255 = vmatprep.subr.bf16.mxu0 0
    %256 = vmatpush2.bf16.msra.mxu0 0
    %257 = vmatprep.subr.bf16.mxu0 0
    %258 = vmatpush2.bf16.msra.mxu0 0
    %259 = vmatprep.subr.bf16.mxu0 0
    %260 = vmatpush2.bf16.msra.mxu0 0
    %261 = vmatprep.subr.bf16.mxu0 0
    %262 = vmatpush2.bf16.msra.mxu0 0
    %263 = vmatprep.subr.bf16.mxu0 0
    %264 = vmatpush2.bf16.msra.mxu0 0
    %265 = vmatprep.subr.bf16.mxu0 0
    %266 = vmatpush2.bf16.msra.mxu0 0
    %267 = vmatprep.subr.bf16.mxu0 0
    %268 = vmatpush2.bf16.msra.mxu0 0
    %269 = vmatprep.subr.bf16.mxu0 0
    %270 = vmatpush2.bf16.msra.mxu0 0
    %271 = vmatprep.mubr.bf16.mxu0 0
    %272 = vmatmul.mubr.bf16.gmra.mxu0 %v216
    %v273 = vpop.f32.mrf.mxu0
    %v274 = vadd.f32 %v161, %v273
    %v275 = vpop.f32.mrf.mxu0
    %v276 = vpop.f32.mrf.mxu0
    %v277 = vadd.f32 %v161, %v276
    %v278 = vpop.f32.mrf.mxu0
    %279 = vmatprep.mubr.bf16.mxu0 0
    %280 = vmatmul.mubr.bf16.gmra.mxu0 %v219
    %v281 = vpop.f32.mrf.mxu0
    %v282 = vadd.f32 %v161, %v281
    %v283 = vpop.f32.mrf.mxu0
    %v284 = vpop.f32.mrf.mxu0
    %v285 = vadd.f32 %v161, %v284
    %v286 = vpop.f32.mrf.mxu0
    %287 = vmatprep.mubr.bf16.mxu0 0
    %288 = vmatmul.mubr.bf16.gmra.mxu0 %v222
    %v289 = vpop.f32.mrf.mxu0
    %v290 = vadd.f32 %v161, %v289
    %v291 = vpop.f32.mrf.mxu0
    %v292 = vpop.f32.mrf.mxu0
    %v293 = vadd.f32 %v161, %v292
    %v294 = vpop.f32.mrf.mxu0
    %295 = vmatprep.mubr.bf16.mxu0 0
    %296 = vmatmul.mubr.bf16.gmra.mxu0 %v225
    %v297 = vpop.f32.mrf.mxu0
    %v298 = vadd.f32 %v161, %v297
    %v299 = vpop.f32.mrf.mxu0
    %v300 = vpop.f32.mrf.mxu0
    %v301 = vadd.f32 %v161, %v300
    %v302 = vpop.f32.mrf.mxu0
    %303 = vmatprep.mubr.bf16.mxu0 0
    %304 = vmatmul.mubr.bf16.gmra.mxu0 %v228
    %v305 = vpop.f32.mrf.mxu0
    %v306 = vadd.f32 %v161, %v305
    %v307 = vpop.f32.mrf.mxu0
    %v308 = vpop.f32.mrf.mxu0
    %v309 = vadd.f32 %v161, %v308
    %v310 = vpop.f32.mrf.mxu0
    %311 = vmatprep.mubr.bf16.mxu0 0
    %312 = vmatmul.mubr.bf16.gmra.mxu0 %v231
    %v313 = vpop.f32.mrf.mxu0
    %v314 = vadd.f32 %v161, %v313
    %v315 = vpop.f32.mrf.mxu0
    %v316 = vpop.f32.mrf.mxu0
    %v317 = vadd.f32 %v161, %v316
    %v318 = vpop.f32.mrf.mxu0
    %319 = vmatprep.mubr.bf16.mxu0 0
    %320 = vmatmul.mubr.bf16.gmra.mxu0 %v234
    %v321 = vpop.f32.mrf.mxu0
    %v322 = vadd.f32 %v161, %v321
    %v323 = vpop.f32.mrf.mxu0
    %v324 = vpop.f32.mrf.mxu0
    %v325 = vadd.f32 %v161, %v324
    %v326 = vpop.f32.mrf.mxu0
    %327 = vmatprep.mubr.bf16.mxu0 0
    %328 = vmatmul.mubr.bf16.gmra.mxu0 %v237
    %v329 = vpop.f32.mrf.mxu0
    %v330 = vadd.f32 %v161, %v329
    %v331 = vpop.f32.mrf.mxu0
    %v332 = vpop.f32.mrf.mxu0
    %v333 = vadd.f32 %v161, %v332
    %v334 = vpop.f32.mrf.mxu0
    %335 = vdwg.mxu0
    %v336 = vld [vmem:[%s3] sm:$0xf]
    %v337 = vld [vmem:[%s3 + $0x4] sm:$0xf]
    %v338 = vld [vmem:[%s3 + $0x8] sm:$0xf]
    %v339 = vld [vmem:[%s3 + $0xc] sm:$0xf]
    %v340 = vld [vmem:[%s4] sm:$0x1]
    %v342 = vlaneseq
    %v343 = vshrl.u32 %v342, 7
    %v344 = vsub.s32 0, %v343
    %v345 = vrot.slane %v340, %v344
    %v349 = vunpack.c.l.b16 %v126
    %v350 = vunpack.c.l.b16 %v127
    %v351 = vrot.slane %v350, 7
    %vm352 = vcmask 1041409
    %v353 = vsel %vm352, %v351, %v349
    %v354 = vpack.c.b16 %v353, %v353
    %v359 = vunpack.c.l.b16 %v336
    %v360 = vunpack.c.l.b16 %v337
    %v361 = vunpack.c.l.b16 %v338
    %v362 = vunpack.c.l.b16 %v339
    %v363 = vpack.c.b16 %v360, %v359
    %v364 = vpack.c.b16 %v362, %v361
    %v368 = vsel %vm72, %v354, 0
    %370 = vmatprep.subr.bf16.mxu0 0
    %371 = vmatpush1.bf16.msra.mxu0 0
    %372 = vmatprep.subr.bf16.mxu0 0
    %373 = vmatpush1.bf16.msra.mxu0 0
    %374 = vmatprep.subr.bf16.mxu0 0
    %375 = vmatpush1.bf16.msra.mxu0 0
    %376 = vmatprep.subr.bf16.mxu0 0
    %377 = vmatpush1.bf16.msra.mxu0 0
    %378 = vmatprep.subr.bf16.mxu0 0
    %379 = vmatpush1.bf16.msra.mxu0 0
    %380 = vmatprep.subr.bf16.mxu0 0
    %381 = vmatpush1.bf16.msra.mxu0 0
    %382 = vmatprep.subr.bf16.mxu0 0
    %383 = vmatpush1.bf16.msra.mxu0 %v364
    %384 = vmatprep.subr.bf16.mxu0 0
    %385 = vmatpush1.bf16.msra.mxu0 %v363
    %386 = vmatprep.subr.bf16.mxu0 0
    %387 = vmatpush2.bf16.msra.mxu0 0
    %388 = vmatprep.subr.bf16.mxu0 0
    %389 = vmatpush2.bf16.msra.mxu0 0
    %390 = vmatprep.subr.bf16.mxu0 0
    %391 = vmatpush2.bf16.msra.mxu0 0
    %392 = vmatprep.subr.bf16.mxu0 0
    %393 = vmatpush2.bf16.msra.mxu0 0
    %394 = vmatprep.subr.bf16.mxu0 0
    %395 = vmatpush2.bf16.msra.mxu0 0
    %396 = vmatprep.subr.bf16.mxu0 0
    %397 = vmatpush2.bf16.msra.mxu0 0
    %398 = vmatprep.subr.bf16.mxu0 0
    %399 = vmatpush2.bf16.msra.mxu0 0
    %400 = vmatprep.subr.bf16.mxu0 0
    %401 = vmatpush2.bf16.msra.mxu0 0
    %402 = vmatprep.mubr.bf16.mxu0 0
    %403 = vmatmul.mubr.bf16.gmra.mxu0 %v368
    %v404 = vpop.f32.mrf.mxu0
    %v405 = vadd.f32 %v345, %v404
    %v406 = vpop.f32.mrf.mxu0
    %v407 = vpop.f32.mrf.mxu0
    %v408 = vpop.f32.mrf.mxu0
    %409 = vdwg.mxu0
    %v410 = vmul.f32 %v405, 0.35355338
    %411 = vmatprep.subr.bf16.mxu0 0
    %412 = vmatpush1.bf16.msra.mxu0 0
    %413 = vmatprep.subr.bf16.mxu0 0
    %414 = vmatpush1.bf16.msra.mxu0 0
    %415 = vmatprep.subr.bf16.mxu0 0
    %416 = vmatpush1.bf16.msra.mxu0 0
    %417 = vmatprep.subr.bf16.mxu0 0
    %418 = vmatpush1.bf16.msra.mxu0 0
    %419 = vmatprep.subr.bf16.mxu0 0
    %420 = vmatpush1.bf16.msra.mxu0 0
    %421 = vmatprep.subr.bf16.mxu0 0
    %422 = vmatpush1.bf16.msra.mxu0 0
    %423 = vmatprep.subr.bf16.mxu0 0
    %424 = vmatpush1.bf16.msra.mxu0 %v212
    %425 = vmatprep.subr.bf16.mxu0 0
    %426 = vmatpush1.bf16.msra.mxu0 %v211
    %427 = vmatprep.subr.bf16.mxu0 0
    %428 = vmatpush2.bf16.msra.mxu0 0
    %429 = vmatprep.subr.bf16.mxu0 0
    %430 = vmatpush2.bf16.msra.mxu0 0
    %431 = vmatprep.subr.bf16.mxu0 0
    %432 = vmatpush2.bf16.msra.mxu0 0
    %433 = vmatprep.subr.bf16.mxu0 0
    %434 = vmatpush2.bf16.msra.mxu0 0
    %435 = vmatprep.subr.bf16.mxu0 0
    %436 = vmatpush2.bf16.msra.mxu0 0
    %437 = vmatprep.subr.bf16.mxu0 0
    %438 = vmatpush2.bf16.msra.mxu0 0
    %439 = vmatprep.subr.bf16.mxu0 0
    %440 = vmatpush2.bf16.msra.mxu0 0
    %441 = vmatprep.subr.bf16.mxu0 0
    %442 = vmatpush2.bf16.msra.mxu0 0
    %443 = vmatprep.mubr.bf16.mxu0 0
    %444 = vmatmul.mubr.bf16.gmra.mxu0 %v368
    %v445 = vpop.f32.mrf.mxu0
    %v446 = vadd.f32 %v161, %v445
    %v447 = vpop.f32.mrf.mxu0
    %v448 = vpop.f32.mrf.mxu0
    %v449 = vpop.f32.mrf.mxu0
    %450 = vdwg.mxu0
    %v453 = vunpack.c.l.s4 1966171168
    %v454 = vunpack.c.0.s8 %v453
    %v455 = vlaneseq
    %v456 = vshrl.u32 %v455, 7
    %v457 = vsub.s32 %v454, %v456
    %v458 = vrot.slane %v410, %v457
    %v459 = vcombine.high %v458, %v458
    %v461 = vunpack.c.l.s4 1966171168
    %v462 = vunpack.c.0.s8 %v461
    %v463 = vlaneseq
    %v464 = vshrl.u32 %v463, 7
    %v465 = vsub.s32 %v462, %v464
    %v466 = vrot.slane %v458, %v465
    %v468 = vunpack.c.l.s4 1966171168
    %v469 = vunpack.c.0.s8 %v468
    %v470 = vlaneseq
    %v471 = vshrl.u32 %v470, 7
    %v472 = vsub.s32 %v469, %v471
    %v473 = vrot.slane %v459, %v472
    %v474 = vlaneseq
    %v475 = vshrl.u32 %v474, 7
    %v476 = vsub.s32 0, %v475
    %v477 = vrot.slane %v466, %v476
    %v478 = vlaneseq
    %v479 = vshrl.u32 %v478, 7
    %v480 = vsub.s32 0, %v479
    %v481 = vrot.slane %v473, %v480
    %v484 = vmul.f32 %v274, %v477
    %v485 = vmul.f32 %v277, %v477
    %v486 = vmul.f32 %v282, %v477
    %v487 = vmul.f32 %v285, %v477
    %v488 = vmul.f32 %v290, %v477
    %v489 = vmul.f32 %v293, %v477
    %v490 = vmul.f32 %v298, %v477
    %v491 = vmul.f32 %v301, %v477
    %v492 = vmul.f32 %v306, %v481
    %v493 = vmul.f32 %v309, %v481
    %v494 = vmul.f32 %v314, %v481
    %v495 = vmul.f32 %v317, %v481
    %v496 = vmul.f32 %v322, %v481
    %v497 = vmul.f32 %v325, %v481
    %v498 = vmul.f32 %v330, %v481
    %v499 = vmul.f32 %v333, %v481
    %v500 = vpack.c.bf16 %v485, %v484
    %v501 = vpack.c.bf16 %v487, %v486
    %v502 = vpack.c.bf16 %v489, %v488
    %v503 = vpack.c.bf16 %v491, %v490
    %v504 = vpack.c.bf16 %v493, %v492
    %v505 = vpack.c.bf16 %v495, %v494
    %v506 = vpack.c.bf16 %v497, %v496
    %v507 = vpack.c.bf16 %v499, %v498
    %v508 = vld [vmem:[%s9] sm:$0xf]
    %v509 = vld [vmem:[%s9 + $0x4] sm:$0xf]
    %v510 = vld [vmem:[%s9 + $0x8] sm:$0xf]
    %v511 = vld [vmem:[%s9 + $0xc] sm:$0xf]
    %v516 = vunpack.c.l.b16 %v508
    %v517 = vunpack.c.l.b16 %v509
    %v518 = vunpack.c.l.b16 %v510
    %v519 = vunpack.c.l.b16 %v511
    %v520 = vpack.c.b16 %v517, %v516
    %v521 = vpack.c.b16 %v519, %v518
    %v525 = vsel %vm72, %v500, 0
    %v528 = vsel %vm72, %v501, 0
    %v531 = vsel %vm72, %v502, 0
    %v534 = vsel %vm72, %v503, 0
    %v537 = vsel %vm72, %v504, 0
    %v540 = vsel %vm72, %v505, 0
    %v543 = vsel %vm72, %v506, 0
    %v546 = vsel %vm72, %v507, 0
    %548 = vmatprep.subr.bf16.mxu0 0
    %549 = vmatpush1.bf16.msra.mxu0 0
    %550 = vmatprep.subr.bf16.mxu0 0
    %551 = vmatpush1.bf16.msra.mxu0 0
    %552 = vmatprep.subr.bf16.mxu0 0
    %553 = vmatpush1.bf16.msra.mxu0 0
    %554 = vmatprep.subr.bf16.mxu0 0
    %555 = vmatpush1.bf16.msra.mxu0 0
    %556 = vmatprep.subr.bf16.mxu0 0
    %557 = vmatpush1.bf16.msra.mxu0 0
    %558 = vmatprep.subr.bf16.mxu0 0
    %559 = vmatpush1.bf16.msra.mxu0 0
    %560 = vmatprep.subr.bf16.mxu0 0
    %561 = vmatpush1.bf16.msra.mxu0 %v521
    %562 = vmatprep.subr.bf16.mxu0 0
    %563 = vmatpush1.bf16.msra.mxu0 %v520
    %564 = vmatprep.subr.bf16.mxu0 0
    %565 = vmatpush2.bf16.msra.mxu0 0
    %566 = vmatprep.subr.bf16.mxu0 0
    %567 = vmatpush2.bf16.msra.mxu0 0
    %568 = vmatprep.subr.bf16.mxu0 0
    %569 = vmatpush2.bf16.msra.mxu0 0
    %570 = vmatprep.subr.bf16.mxu0 0
    %571 = vmatpush2.bf16.msra.mxu0 0
    %572 = vmatprep.subr.bf16.mxu0 0
    %573 = vmatpush2.bf16.msra.mxu0 0
    %574 = vmatprep.subr.bf16.mxu0 0
    %575 = vmatpush2.bf16.msra.mxu0 0
    %576 = vmatprep.subr.bf16.mxu0 0
    %577 = vmatpush2.bf16.msra.mxu0 0
    %578 = vmatprep.subr.bf16.mxu0 0
    %579 = vmatpush2.bf16.msra.mxu0 0
    %580 = vmatprep.mubr.bf16.mxu0 0
    %581 = vmatmul.mubr.bf16.gmra.mxu0 %v525
    %v582 = vpop.f32.mrf.mxu0
    %v583 = vadd.f32 0.0, %v582
    %v584 = vpop.f32.mrf.mxu0
    %v585 = vpop.f32.mrf.mxu0
    %v586 = vadd.f32 0.0, %v585
    %v587 = vpop.f32.mrf.mxu0
    %588 = vmatprep.mubr.bf16.mxu0 0
    %589 = vmatmul.mubr.bf16.gmra.mxu0 %v528
    %v590 = vpop.f32.mrf.mxu0
    %v591 = vadd.f32 0.0, %v590
    %v592 = vpop.f32.mrf.mxu0
    %v593 = vpop.f32.mrf.mxu0
    %v594 = vadd.f32 0.0, %v593
    %v595 = vpop.f32.mrf.mxu0
    %596 = vmatprep.mubr.bf16.mxu0 0
    %597 = vmatmul.mubr.bf16.gmra.mxu0 %v531
    %v598 = vpop.f32.mrf.mxu0
    %v599 = vadd.f32 0.0, %v598
    %v600 = vpop.f32.mrf.mxu0
    %v601 = vpop.f32.mrf.mxu0
    %v602 = vadd.f32 0.0, %v601
    %v603 = vpop.f32.mrf.mxu0
    %604 = vmatprep.mubr.bf16.mxu0 0
    %605 = vmatmul.mubr.bf16.gmra.mxu0 %v534
    %v606 = vpop.f32.mrf.mxu0
    %v607 = vadd.f32 0.0, %v606
    %v608 = vpop.f32.mrf.mxu0
    %v609 = vpop.f32.mrf.mxu0
    %v610 = vadd.f32 0.0, %v609
    %v611 = vpop.f32.mrf.mxu0
    %612 = vmatprep.mubr.bf16.mxu0 0
    %613 = vmatmul.mubr.bf16.gmra.mxu0 %v537
    %v614 = vpop.f32.mrf.mxu0
    %v615 = vadd.f32 0.0, %v614
    %v616 = vpop.f32.mrf.mxu0
    %v617 = vpop.f32.mrf.mxu0
    %v618 = vadd.f32 0.0, %v617
    %v619 = vpop.f32.mrf.mxu0
    %620 = vmatprep.mubr.bf16.mxu0 0
    %621 = vmatmul.mubr.bf16.gmra.mxu0 %v540
    %v622 = vpop.f32.mrf.mxu0
    %v623 = vadd.f32 0.0, %v622
    %v624 = vpop.f32.mrf.mxu0
    %v625 = vpop.f32.mrf.mxu0
    %v626 = vadd.f32 0.0, %v625
    %v627 = vpop.f32.mrf.mxu0
    %628 = vmatprep.mubr.bf16.mxu0 0
    %629 = vmatmul.mubr.bf16.gmra.mxu0 %v543
    %v630 = vpop.f32.mrf.mxu0
    %v631 = vadd.f32 0.0, %v630
    %v632 = vpop.f32.mrf.mxu0
    %v633 = vpop.f32.mrf.mxu0
    %v634 = vadd.f32 0.0, %v633
    %v635 = vpop.f32.mrf.mxu0
    %636 = vmatprep.mubr.bf16.mxu0 0
    %637 = vmatmul.mubr.bf16.gmra.mxu0 %v546
    %v638 = vpop.f32.mrf.mxu0
    %v639 = vadd.f32 0.0, %v638
    %v640 = vpop.f32.mrf.mxu0
    %v641 = vpop.f32.mrf.mxu0
    %v642 = vadd.f32 0.0, %v641
    %v643 = vpop.f32.mrf.mxu0
    %644 = vdwg.mxu0
    %v645 = vmul.f32 %v446, %v410
    %v646 = vpack.c.bf16 %v645, %v645
    %v648 = vsel %vm72, %v646, 0
    %650 = vmatprep.subr.bf16.mxu0 0
    %651 = vmatpush1.bf16.msra.mxu0 0
    %652 = vmatprep.subr.bf16.mxu0 0
    %653 = vmatpush1.bf16.msra.mxu0 0
    %654 = vmatprep.subr.bf16.mxu0 0
    %655 = vmatpush1.bf16.msra.mxu0 0
    %656 = vmatprep.subr.bf16.mxu0 0
    %657 = vmatpush1.bf16.msra.mxu0 0
    %658 = vmatprep.subr.bf16.mxu0 0
    %659 = vmatpush1.bf16.msra.mxu0 0
    %660 = vmatprep.subr.bf16.mxu0 0
    %661 = vmatpush1.bf16.msra.mxu0 0
    %662 = vmatprep.subr.bf16.mxu0 0
    %663 = vmatpush1.bf16.msra.mxu0 %v521
    %664 = vmatprep.subr.bf16.mxu0 0
    %665 = vmatpush1.bf16.msra.mxu0 %v520
    %666 = vmatprep.subr.bf16.mxu0 0
    %667 = vmatpush2.bf16.msra.mxu0 0
    %668 = vmatprep.subr.bf16.mxu0 0
    %669 = vmatpush2.bf16.msra.mxu0 0
    %670 = vmatprep.subr.bf16.mxu0 0
    %671 = vmatpush2.bf16.msra.mxu0 0
    %672 = vmatprep.subr.bf16.mxu0 0
    %673 = vmatpush2.bf16.msra.mxu0 0
    %674 = vmatprep.subr.bf16.mxu0 0
    %675 = vmatpush2.bf16.msra.mxu0 0
    %676 = vmatprep.subr.bf16.mxu0 0
    %677 = vmatpush2.bf16.msra.mxu0 0
    %678 = vmatprep.subr.bf16.mxu0 0
    %679 = vmatpush2.bf16.msra.mxu0 0
    %680 = vmatprep.subr.bf16.mxu0 0
    %681 = vmatpush2.bf16.msra.mxu0 0
    %682 = vmatprep.mubr.bf16.mxu0 0
    %683 = vmatmul.mubr.bf16.gmra.mxu0 %v648
    %v684 = vpop.f32.mrf.mxu0
    %v685 = vadd.f32 0.0, %v684
    %v686 = vpop.f32.mrf.mxu0
    %v687 = vpop.f32.mrf.mxu0
    %v688 = vpop.f32.mrf.mxu0
    %689 = vdwg.mxu0
    %vm690 = vcmask 31744
    %v691 = vsel %vm690, %v583, -inf
    %v692 = vsel %vm690, %v586, -inf
    %v693 = vsel %vm690, %v591, -inf
    %v694 = vmax.f32 %v691, %v693
    %v695 = vsel %vm690, %v594, -inf
    %v696 = vmax.f32 %v692, %v695
    %v697 = vsel %vm690, %v599, -inf
    %v698 = vmax.f32 %v694, %v697
    %v699 = vsel %vm690, %v602, -inf
    %v700 = vmax.f32 %v696, %v699
    %v701 = vsel %vm690, %v607, -inf
    %v702 = vmax.f32 %v698, %v701
    %v703 = vsel %vm690, %v610, -inf
    %v704 = vmax.f32 %v700, %v703
    %v705 = vmax.f32 %v702, %v704
    %v706 = vrot.slane %v705, 4
    %v707 = vmax.f32 %v705, %v706
    %v708 = vrot.slane %v707, 2
    %v709 = vmax.f32 %v707, %v708
    %v710 = vrot.slane %v709, 1
    %v711 = vmax.f32 %v709, %v710
    %v712 = vsel %vm690, %v615, -inf
    %v713 = vsel %vm690, %v618, -inf
    %v714 = vsel %vm690, %v623, -inf
    %v715 = vmax.f32 %v712, %v714
    %v716 = vsel %vm690, %v626, -inf
    %v717 = vmax.f32 %v713, %v716
    %v718 = vsel %vm690, %v631, -inf
    %v719 = vmax.f32 %v715, %v718
    %v720 = vsel %vm690, %v634, -inf
    %v721 = vmax.f32 %v717, %v720
    %v722 = vsel %vm690, %v639, -inf
    %v723 = vmax.f32 %v719, %v722
    %v724 = vsel %vm690, %v642, -inf
    %v725 = vmax.f32 %v721, %v724
    %v726 = vmax.f32 %v723, %v725
    %v727 = vrot.slane %v726, 4
    %v728 = vmax.f32 %v726, %v727
    %v729 = vrot.slane %v728, 2
    %v730 = vmax.f32 %v728, %v729
    %v731 = vrot.slane %v730, 1
    %v732 = vmax.f32 %v730, %v731
    %v734 = vrot.slane %v685, 1
    %v737 = vmax.f32 %v711, %v685
    %v738 = vmax.f32 %v732, %v734
    %v739 = vlaneseq
    %v740 = vshrl.u32 %v739, 7
    %v741 = vsub.s32 0, %v740
    %v742 = vrot.slane %v737, %v741
    %v743 = vlaneseq
    %v744 = vshrl.u32 %v743, 7
    %v745 = vsub.s32 0, %v744
    %v746 = vrot.slane %v738, %v745
    %v747 = vsub.f32 %v583, %v742
    %v748 = vsub.f32 %v586, %v742
    %v749 = vsub.f32 %v591, %v742
    %v750 = vsub.f32 %v594, %v742
    %v751 = vsub.f32 %v599, %v742
    %v752 = vsub.f32 %v602, %v742
    %v753 = vsub.f32 %v607, %v742
    %v754 = vsub.f32 %v610, %v742
    %v755 = vsub.f32 %v615, %v746
    %v756 = vsub.f32 %v618, %v746
    %v757 = vsub.f32 %v623, %v746
    %v758 = vsub.f32 %v626, %v746
    %v759 = vsub.f32 %v631, %v746
    %v760 = vsub.f32 %v634, %v746
    %v761 = vsub.f32 %v639, %v746
    %v762 = vsub.f32 %v642, %v746
    %v763 = vmul.f32 %v747, 1.442695
    %v764 = vpow.pop %v763
    %v765 = vmul.f32 %v748, 1.442695
    %v766 = vpow.pop %v765
    %v767 = vmul.f32 %v749, 1.442695
    %v768 = vpow.pop %v767
    %v769 = vmul.f32 %v750, 1.442695
    %v770 = vpow.pop %v769
    %v771 = vmul.f32 %v751, 1.442695
    %v772 = vpow.pop %v771
    %v773 = vmul.f32 %v752, 1.442695
    %v774 = vpow.pop %v773
    %v775 = vmul.f32 %v753, 1.442695
    %v776 = vpow.pop %v775
    %v777 = vmul.f32 %v754, 1.442695
    %v778 = vpow.pop %v777
    %v779 = vmul.f32 %v755, 1.442695
    %v780 = vpow.pop %v779
    %v781 = vmul.f32 %v756, 1.442695
    %v782 = vpow.pop %v781
    %v783 = vmul.f32 %v757, 1.442695
    %v784 = vpow.pop %v783
    %v785 = vmul.f32 %v758, 1.442695
    %v786 = vpow.pop %v785
    %v787 = vmul.f32 %v759, 1.442695
    %v788 = vpow.pop %v787
    %v789 = vmul.f32 %v760, 1.442695
    %v790 = vpow.pop %v789
    %v791 = vmul.f32 %v761, 1.442695
    %v792 = vpow.pop %v791
    %v793 = vmul.f32 %v762, 1.442695
    %v794 = vpow.pop %v793
    %v797 = vrot.slane %v738, 7
    %v798 = vsel %vm352, %v797, %v737
    %v800 = vsub.f32 %v685, %v798
    %v801 = vmul.f32 %v800, 1.442695
    %v802 = vpow.pop %v801
    %v803 = vsel %vm690, %v764, 0.0
    %v804 = vsel %vm690, %v766, 0.0
    %v805 = vadd.f32 %v803, %v804
    %v806 = vsel %vm690, %v768, 0.0
    %v807 = vadd.f32 %v805, %v806
    %v808 = vsel %vm690, %v770, 0.0
    %v809 = vadd.f32 %v807, %v808
    %v810 = vsel %vm690, %v772, 0.0
    %v811 = vadd.f32 %v809, %v810
    %v812 = vsel %vm690, %v774, 0.0
    %v813 = vadd.f32 %v811, %v812
    %v814 = vsel %vm690, %v776, 0.0
    %v815 = vadd.f32 %v813, %v814
    %v816 = vsel %vm690, %v778, 0.0
    %v817 = vadd.f32 %v815, %v816
    %v818 = vrot.slane %v817, 4
    %v819 = vadd.f32 %v817, %v818
    %v820 = vrot.slane %v819, 2
    %v821 = vadd.f32 %v819, %v820
    %v822 = vrot.slane %v821, 1
    %v823 = vadd.f32 %v821, %v822
    %v824 = vsel %vm690, %v780, 0.0
    %v825 = vsel %vm690, %v782, 0.0
    %v826 = vadd.f32 %v824, %v825
    %v827 = vsel %vm690, %v784, 0.0
    %v828 = vadd.f32 %v826, %v827
    %v829 = vsel %vm690, %v786, 0.0
    %v830 = vadd.f32 %v828, %v829
    %v831 = vsel %vm690, %v788, 0.0
    %v832 = vadd.f32 %v830, %v831
    %v833 = vsel %vm690, %v790, 0.0
    %v834 = vadd.f32 %v832, %v833
    %v835 = vsel %vm690, %v792, 0.0
    %v836 = vadd.f32 %v834, %v835
    %v837 = vsel %vm690, %v794, 0.0
    %v838 = vadd.f32 %v836, %v837
    %v839 = vrot.slane %v838, 4
    %v840 = vadd.f32 %v838, %v839
    %v841 = vrot.slane %v840, 2
    %v842 = vadd.f32 %v840, %v841
    %v843 = vrot.slane %v842, 1
    %v844 = vadd.f32 %v842, %v843
    %v846 = vrot.slane %v802, 1
    %v849 = vadd.f32 %v823, %v802
    %v850 = vadd.f32 %v844, %v846
    %v851 = vrcp.pop %v849
    %v852 = vmul.f32 1.0, %v851
    %v853 = vrcp.pop %v850
    %v854 = vmul.f32 1.0, %v853
    %v855 = vlaneseq
    %v856 = vshrl.u32 %v855, 7
    %v857 = vsub.s32 0, %v856
    %v858 = vrot.slane %v852, %v857
    %v859 = vlaneseq
    %v860 = vshrl.u32 %v859, 7
    %v861 = vsub.s32 0, %v860
    %v862 = vrot.slane %v854, %v861
    %v863 = vmul.f32 %v764, %v858
    %v864 = vmul.f32 %v766, %v858
    %v865 = vmul.f32 %v768, %v858
    %v866 = vmul.f32 %v770, %v858
    %v867 = vmul.f32 %v772, %v858
    %v868 = vmul.f32 %v774, %v858
    %v869 = vmul.f32 %v776, %v858
    %v870 = vmul.f32 %v778, %v858
    %v871 = vmul.f32 %v780, %v862
    %v872 = vmul.f32 %v782, %v862
    %v873 = vmul.f32 %v784, %v862
    %v874 = vmul.f32 %v786, %v862
    %v875 = vmul.f32 %v788, %v862
    %v876 = vmul.f32 %v790, %v862
    %v877 = vmul.f32 %v792, %v862
    %v878 = vmul.f32 %v794, %v862
    %v881 = vrot.slane %v854, 7
    %v882 = vsel %vm352, %v881, %v852
    %v884 = vmul.f32 %v802, %v882
    %v885 = vpack.c.bf16 %v864, %v863
    %v886 = vpack.c.bf16 %v866, %v865
    %v887 = vpack.c.bf16 %v868, %v867
    %v888 = vpack.c.bf16 %v870, %v869
    %v889 = vpack.c.bf16 %v872, %v871
    %v890 = vpack.c.bf16 %v874, %v873
    %v891 = vpack.c.bf16 %v876, %v875
    %v892 = vpack.c.bf16 %v878, %v877
    %v893 = vld [vmem:[%s10] sm:$0x3]
    %v895 = vsel %vm690, %v885, 0
    %v898 = vsel %vm690, %v886, 0
    %v901 = vsel %vm690, %v887, 0
    %v904 = vsel %vm690, %v888, 0
    %v907 = vsel %vm690, %v889, 0
    %v910 = vsel %vm690, %v890, 0
    %v913 = vsel %vm690, %v891, 0
    %v916 = vsel %vm690, %v892, 0
    %vm918 = vcmask 1041408
    %v920 = vsel %vm918, %v893, 0
    %922 = vmatprep.subr.bf16.mxu0 0
    %923 = vmatpush1.bf16.msra.mxu0 0
    %924 = vmatprep.subr.bf16.mxu0 0
    %925 = vmatpush1.bf16.msra.mxu0 0
    %926 = vmatprep.subr.bf16.mxu0 0
    %927 = vmatpush1.bf16.msra.mxu0 0
    %928 = vmatprep.subr.bf16.mxu0 0
    %929 = vmatpush1.bf16.msra.mxu0 0
    %930 = vmatprep.subr.bf16.mxu0 0
    %931 = vmatpush1.bf16.msra.mxu0 0
    %932 = vmatprep.subr.bf16.mxu0 0
    %933 = vmatpush1.bf16.msra.mxu0 0
    %934 = vmatprep.subr.bf16.mxu0 0
    %935 = vmatpush1.bf16.msra.mxu0 0
    %936 = vmatprep.subr.bf16.mxu0 0
    %937 = vmatpush1.bf16.msra.mxu0 %v920
    %938 = vmatprep.subr.bf16.mxu0 0
    %939 = vmatpush2.bf16.msra.mxu0 0
    %940 = vmatprep.subr.bf16.mxu0 0
    %941 = vmatpush2.bf16.msra.mxu0 0
    %942 = vmatprep.subr.bf16.mxu0 0
    %943 = vmatpush2.bf16.msra.mxu0 0
    %944 = vmatprep.subr.bf16.mxu0 0
    %945 = vmatpush2.bf16.msra.mxu0 0
    %946 = vmatprep.subr.bf16.mxu0 0
    %947 = vmatpush2.bf16.msra.mxu0 0
    %948 = vmatprep.subr.bf16.mxu0 0
    %949 = vmatpush2.bf16.msra.mxu0 0
    %950 = vmatprep.subr.bf16.mxu0 0
    %951 = vmatpush2.bf16.msra.mxu0 0
    %952 = vmatprep.subr.bf16.mxu0 0
    %953 = vmatpush2.bf16.msra.mxu0 0
    %954 = vmatprep.mubr.bf16.mxu0 0
    %955 = vmatmul.mubr.bf16.gmra.mxu0 %v895
    %v956 = vpop.f32.mrf.mxu0
    %v957 = vadd.f32 0.0, %v956
    %v958 = vpop.f32.mrf.mxu0
    %v959 = vpop.f32.mrf.mxu0
    %v960 = vadd.f32 0.0, %v959
    %v961 = vpop.f32.mrf.mxu0
    %962 = vmatprep.mubr.bf16.mxu0 0
    %963 = vmatmul.mubr.bf16.gmra.mxu0 %v898
    %v964 = vpop.f32.mrf.mxu0
    %v965 = vadd.f32 0.0, %v964
    %v966 = vpop.f32.mrf.mxu0
    %v967 = vpop.f32.mrf.mxu0
    %v968 = vadd.f32 0.0, %v967
    %v969 = vpop.f32.mrf.mxu0
    %970 = vmatprep.mubr.bf16.mxu0 0
    %971 = vmatmul.mubr.bf16.gmra.mxu0 %v901
    %v972 = vpop.f32.mrf.mxu0
    %v973 = vadd.f32 0.0, %v972
    %v974 = vpop.f32.mrf.mxu0
    %v975 = vpop.f32.mrf.mxu0
    %v976 = vadd.f32 0.0, %v975
    %v977 = vpop.f32.mrf.mxu0
    %978 = vmatprep.mubr.bf16.mxu0 0
    %979 = vmatmul.mubr.bf16.gmra.mxu0 %v904
    %v980 = vpop.f32.mrf.mxu0
    %v981 = vadd.f32 0.0, %v980
    %v982 = vpop.f32.mrf.mxu0
    %v983 = vpop.f32.mrf.mxu0
    %v984 = vadd.f32 0.0, %v983
    %v985 = vpop.f32.mrf.mxu0
    %986 = vmatprep.mubr.bf16.mxu0 0
    %987 = vmatmul.mubr.bf16.gmra.mxu0 %v907
    %v988 = vpop.f32.mrf.mxu0
    %v989 = vadd.f32 0.0, %v988
    %v990 = vpop.f32.mrf.mxu0
    %v991 = vpop.f32.mrf.mxu0
    %v992 = vadd.f32 0.0, %v991
    %v993 = vpop.f32.mrf.mxu0
    %994 = vmatprep.mubr.bf16.mxu0 0
    %995 = vmatmul.mubr.bf16.gmra.mxu0 %v910
    %v996 = vpop.f32.mrf.mxu0
    %v997 = vadd.f32 0.0, %v996
    %v998 = vpop.f32.mrf.mxu0
    %v999 = vpop.f32.mrf.mxu0
    %v1000 = vadd.f32 0.0, %v999
    %v1001 = vpop.f32.mrf.mxu0
    %1002 = vmatprep.mubr.bf16.mxu0 0
    %1003 = vmatmul.mubr.bf16.gmra.mxu0 %v913
    %v1004 = vpop.f32.mrf.mxu0
    %v1005 = vadd.f32 0.0, %v1004
    %v1006 = vpop.f32.mrf.mxu0
    %v1007 = vpop.f32.mrf.mxu0
    %v1008 = vadd.f32 0.0, %v1007
    %v1009 = vpop.f32.mrf.mxu0
    %1010 = vmatprep.mubr.bf16.mxu0 0
    %1011 = vmatmul.mubr.bf16.gmra.mxu0 %v916
    %v1012 = vpop.f32.mrf.mxu0
    %v1013 = vadd.f32 0.0, %v1012
    %v1014 = vpop.f32.mrf.mxu0
    %v1015 = vpop.f32.mrf.mxu0
    %v1016 = vadd.f32 0.0, %v1015
    %v1017 = vpop.f32.mrf.mxu0
    %1018 = vdwg.mxu0
    %v1019 = vpack.c.bf16 %v884, %v884
    %v1021 = vsel %vm690, %v1019, 0
    %1023 = vmatprep.subr.bf16.mxu0 0
    %1024 = vmatpush1.bf16.msra.mxu0 0
    %1025 = vmatprep.subr.bf16.mxu0 0
    %1026 = vmatpush1.bf16.msra.mxu0 0
    %1027 = vmatprep.subr.bf16.mxu0 0
    %1028 = vmatpush1.bf16.msra.mxu0 0
    %1029 = vmatprep.subr.bf16.mxu0 0
    %1030 = vmatpush1.bf16.msra.mxu0 0
    %1031 = vmatprep.subr.bf16.mxu0 0
    %1032 = vmatpush1.bf16.msra.mxu0 0
    %1033 = vmatprep.subr.bf16.mxu0 0
    %1034 = vmatpush1.bf16.msra.mxu0 0
    %1035 = vmatprep.subr.bf16.mxu0 0
    %1036 = vmatpush1.bf16.msra.mxu0 0
    %1037 = vmatprep.subr.bf16.mxu0 0
    %1038 = vmatpush1.bf16.msra.mxu0 %v920
    %1039 = vmatprep.subr.bf16.mxu0 0
    %1040 = vmatpush2.bf16.msra.mxu0 0
    %1041 = vmatprep.subr.bf16.mxu0 0
    %1042 = vmatpush2.bf16.msra.mxu0 0
    %1043 = vmatprep.subr.bf16.mxu0 0
    %1044 = vmatpush2.bf16.msra.mxu0 0
    %1045 = vmatprep.subr.bf16.mxu0 0
    %1046 = vmatpush2.bf16.msra.mxu0 0
    %1047 = vmatprep.subr.bf16.mxu0 0
    %1048 = vmatpush2.bf16.msra.mxu0 0
    %1049 = vmatprep.subr.bf16.mxu0 0
    %1050 = vmatpush2.bf16.msra.mxu0 0
    %1051 = vmatprep.subr.bf16.mxu0 0
    %1052 = vmatpush2.bf16.msra.mxu0 0
    %1053 = vmatprep.subr.bf16.mxu0 0
    %1054 = vmatpush2.bf16.msra.mxu0 0
    %1055 = vmatprep.mubr.bf16.mxu0 0
    %1056 = vmatmul.mubr.bf16.gmra.mxu0 %v1021
    %v1057 = vpop.f32.mrf.mxu0
    %v1058 = vadd.f32 0.0, %v1057
    %v1059 = vpop.f32.mrf.mxu0
    %v1060 = vpop.f32.mrf.mxu0
    %v1061 = vpop.f32.mrf.mxu0
    %1062 = vdwg.mxu0
    %1079 = vrot.lane.b32.xlu0 %v274, 96
    %v1080 = vpop.permute.xlu0 %1079
    %1081 = vrot.lane.b32.xlu0 %v277, 96
    %v1082 = vpop.permute.xlu0 %1081
    %1083 = vrot.lane.b32.xlu0 %v282, 96
    %v1084 = vpop.permute.xlu0 %1083
    %1085 = vrot.lane.b32.xlu0 %v285, 96
    %v1086 = vpop.permute.xlu0 %1085
    %1087 = vrot.lane.b32.xlu0 %v290, 96
    %v1088 = vpop.permute.xlu0 %1087
    %1089 = vrot.lane.b32.xlu0 %v293, 96
    %v1090 = vpop.permute.xlu0 %1089
    %1091 = vrot.lane.b32.xlu0 %v298, 96
    %v1092 = vpop.permute.xlu0 %1091
    %1093 = vrot.lane.b32.xlu0 %v301, 96
    %v1094 = vpop.permute.xlu0 %1093
    %1095 = vrot.lane.b32.xlu0 %v306, 96
    %v1096 = vpop.permute.xlu0 %1095
    %1097 = vrot.lane.b32.xlu0 %v309, 96
    %v1098 = vpop.permute.xlu0 %1097
    %1099 = vrot.lane.b32.xlu0 %v314, 96
    %v1100 = vpop.permute.xlu0 %1099
    %1101 = vrot.lane.b32.xlu0 %v317, 96
    %v1102 = vpop.permute.xlu0 %1101
    %1103 = vrot.lane.b32.xlu0 %v322, 96
    %v1104 = vpop.permute.xlu0 %1103
    %1105 = vrot.lane.b32.xlu0 %v325, 96
    %v1106 = vpop.permute.xlu0 %1105
    %1107 = vrot.lane.b32.xlu0 %v330, 96
    %v1108 = vpop.permute.xlu0 %1107
    %1109 = vrot.lane.b32.xlu0 %v333, 96
    %v1110 = vpop.permute.xlu0 %1109
    %v1127 = vmul.f32 %v957, %v1080
    %v1128 = vmul.f32 %v960, %v1082
    %v1129 = vmul.f32 %v965, %v1084
    %v1130 = vmul.f32 %v968, %v1086
    %v1131 = vmul.f32 %v973, %v1088
    %v1132 = vmul.f32 %v976, %v1090
    %v1133 = vmul.f32 %v981, %v1092
    %v1134 = vmul.f32 %v984, %v1094
    %v1135 = vmul.f32 %v989, %v1096
    %v1136 = vmul.f32 %v992, %v1098
    %v1137 = vmul.f32 %v997, %v1100
    %v1138 = vmul.f32 %v1000, %v1102
    %v1139 = vmul.f32 %v1005, %v1104
    %v1140 = vmul.f32 %v1008, %v1106
    %v1141 = vmul.f32 %v1013, %v1108
    %v1142 = vmul.f32 %v1016, %v1110
    %v1143 = vsel %vm72, %v1127, 0.0
    %v1144 = vsel %vm72, %v1128, 0.0
    %v1145 = vadd.f32 %v1143, %v1144
    %v1146 = vsel %vm72, %v1129, 0.0
    %v1147 = vadd.f32 %v1145, %v1146
    %v1148 = vsel %vm72, %v1130, 0.0
    %v1149 = vadd.f32 %v1147, %v1148
    %v1150 = vsel %vm72, %v1131, 0.0
    %v1151 = vadd.f32 %v1149, %v1150
    %v1152 = vsel %vm72, %v1132, 0.0
    %v1153 = vadd.f32 %v1151, %v1152
    %v1154 = vsel %vm72, %v1133, 0.0
    %v1155 = vadd.f32 %v1153, %v1154
    %v1156 = vsel %vm72, %v1134, 0.0
    %v1157 = vadd.f32 %v1155, %v1156
    %v1158 = vrot.slane %v1157, 4
    %v1159 = vadd.f32 %v1157, %v1158
    %v1160 = vrot.slane %v1159, 2
    %v1161 = vadd.f32 %v1159, %v1160
    %v1162 = vrot.slane %v1161, 1
    %v1163 = vadd.f32 %v1161, %v1162
    %v1164 = vsel %vm72, %v1135, 0.0
    %v1165 = vsel %vm72, %v1136, 0.0
    %v1166 = vadd.f32 %v1164, %v1165
    %v1167 = vsel %vm72, %v1137, 0.0
    %v1168 = vadd.f32 %v1166, %v1167
    %v1169 = vsel %vm72, %v1138, 0.0
    %v1170 = vadd.f32 %v1168, %v1169
    %v1171 = vsel %vm72, %v1139, 0.0
    %v1172 = vadd.f32 %v1170, %v1171
    %v1173 = vsel %vm72, %v1140, 0.0
    %v1174 = vadd.f32 %v1172, %v1173
    %v1175 = vsel %vm72, %v1141, 0.0
    %v1176 = vadd.f32 %v1174, %v1175
    %v1177 = vsel %vm72, %v1142, 0.0
    %v1178 = vadd.f32 %v1176, %v1177
    %v1179 = vrot.slane %v1178, 4
    %v1180 = vadd.f32 %v1178, %v1179
    %v1181 = vrot.slane %v1180, 2
    %v1182 = vadd.f32 %v1180, %v1181
    %v1183 = vrot.slane %v1182, 1
    %v1184 = vadd.f32 %v1182, %v1183
    %1186 = vrot.lane.b32.xlu0 %v446, 96
    %v1187 = vpop.permute.xlu0 %1186
    %v1189 = vmul.f32 %v1058, %v1187
    %v1191 = vrot.slane %v1189, 1
    %v1194 = vadd.f32 %v1163, %v1189
    %v1195 = vadd.f32 %v1184, %v1191
    %v1196 = vpack.c.bf16 %v1194, %v1194
    %v1197 = vpack.c.bf16 %v1195, %v1195
    %v1198 = vld [vmem:[%s7] sm:$0xf]
    %v1199 = vld [vmem:[%s7 + $0x4] sm:$0xf]
    %v1200 = vld [vmem:[%s7 + $0x8] sm:$0xf]
    %v1201 = vld [vmem:[%s7 + $0xc] sm:$0xf]
    %v1202 = vld [vmem:[%s8] sm:$0x1]
    %v1204 = vlaneseq
    %v1205 = vshrl.u32 %v1204, 7
    %v1206 = vsub.s32 0, %v1205
    %v1207 = vrot.slane %v1202, %v1206
    %v1211 = vunpack.c.l.b16 %v1196
    %v1212 = vunpack.c.l.b16 %v1197
    %v1213 = vrot.slane %v1212, 7
    %v1214 = vsel %vm352, %v1213, %v1211
    %v1215 = vpack.c.b16 %v1214, %v1214
    %v1220 = vunpack.c.l.b16 %v1198
    %v1221 = vunpack.c.l.b16 %v1199
    %v1222 = vunpack.c.l.b16 %v1200
    %v1223 = vunpack.c.l.b16 %v1201
    %v1224 = vpack.c.b16 %v1221, %v1220
    %v1225 = vpack.c.b16 %v1223, %v1222
    %v1229 = vsel %vm72, %v1215, 0
    %1231 = vmatprep.subr.bf16.mxu0 0
    %1232 = vmatpush1.bf16.msra.mxu0 0
    %1233 = vmatprep.subr.bf16.mxu0 0
    %1234 = vmatpush1.bf16.msra.mxu0 0
    %1235 = vmatprep.subr.bf16.mxu0 0
    %1236 = vmatpush1.bf16.msra.mxu0 0
    %1237 = vmatprep.subr.bf16.mxu0 0
    %1238 = vmatpush1.bf16.msra.mxu0 0
    %1239 = vmatprep.subr.bf16.mxu0 0
    %1240 = vmatpush1.bf16.msra.mxu0 0
    %1241 = vmatprep.subr.bf16.mxu0 0
    %1242 = vmatpush1.bf16.msra.mxu0 0
    %1243 = vmatprep.subr.bf16.mxu0 0
    %1244 = vmatpush1.bf16.msra.mxu0 %v1225
    %1245 = vmatprep.subr.bf16.mxu0 0
    %1246 = vmatpush1.bf16.msra.mxu0 %v1224
    %1247 = vmatprep.subr.bf16.mxu0 0
    %1248 = vmatpush2.bf16.msra.mxu0 0
    %1249 = vmatprep.subr.bf16.mxu0 0
    %1250 = vmatpush2.bf16.msra.mxu0 0
    %1251 = vmatprep.subr.bf16.mxu0 0
    %1252 = vmatpush2.bf16.msra.mxu0 0
    %1253 = vmatprep.subr.bf16.mxu0 0
    %1254 = vmatpush2.bf16.msra.mxu0 0
    %1255 = vmatprep.subr.bf16.mxu0 0
    %1256 = vmatpush2.bf16.msra.mxu0 0
    %1257 = vmatprep.subr.bf16.mxu0 0
    %1258 = vmatpush2.bf16.msra.mxu0 0
    %1259 = vmatprep.subr.bf16.mxu0 0
    %1260 = vmatpush2.bf16.msra.mxu0 0
    %1261 = vmatprep.subr.bf16.mxu0 0
    %1262 = vmatpush2.bf16.msra.mxu0 0
    %1263 = vmatprep.mubr.bf16.mxu0 0
    %1264 = vmatmul.mubr.bf16.gmra.mxu0 %v1229
    %v1265 = vpop.f32.mrf.mxu0
    %v1266 = vadd.f32 %v1207, %v1265
    %v1267 = vpop.f32.mrf.mxu0
    %v1268 = vpop.f32.mrf.mxu0
    %v1269 = vpop.f32.mrf.mxu0
    %1270 = vdwg.mxu0
    %vm1271 = vcmask 517120
    %1272 = vst.msk [vmem:[#allocation2] sm:$0x3] %vm1271, %v1266
    // Predicated region
    $region46: #{tpu_custom_call.1} parent=1 // pred_check
      _
    $region47: #{tpu_custom_call.1} parent=1 // pred_check_branch
      %1274 = sbr.rel (0) target = $region49
    $region48: #{tpu_custom_call.1} parent=1 // pred_region
      %s1276 = ssub.s32 32, 32
      %1277 = vsyncadd [#allocation3], %s1276
      %s1279 = sshll.u32 [#allocation2], 4
      %s1280 = int_to_ptr.vmem [resolvable:$true] %s1279
      %1282 = dma.vmem_to_hbm [thread:$0]  %s1280, 32, %s11, [#allocation3]
    $region49: #{tpu_custom_call.1} parent=1 // pred_fallthru
      _
    // Predicated region
    $region50: #{tpu_custom_call.1} parent=1 // pred_check
      _
    $region51: #{tpu_custom_call.1} parent=1 // pred_check_branch
      %1284 = sbr.rel (0) target = $region53
    $region52: #{tpu_custom_call.1} parent=1 // pred_region
      %1285 = dma.done [#allocation3], 32
    $region53: #{tpu_custom_call.1} parent=1 // pred_fallthru
      _
    %1286 = vsyncpa [#allocation3], 1

// kernel: tpu_custom_call.1
$region0: #{tpu_custom_call.1}
  #allocation0 [shape = 'u32[]', space=smem, size = 0x4, offset = 0x4, fixed_abs, tag = 'smem constant byte address 0x4 - core index']
  #allocation1 [shape = 'u32[144,128]{1,0:T(1,128)}', space=vmem, size = 0x12000, scoped, tag = 'internal scratch']
  %s0 = inlined_call_operand.vmem [shape: bf16[2,64,32], index: 0, kind: input, shape index: {}]
  %s1 = inlined_call_operand.vmem [shape: bf16[1,32], index: 1, kind: input, shape index: {}]
  %s2 = inlined_call_operand.vmem [shape: bf16[64,32], index: 2, kind: input, shape index: {}]
  %s3 = inlined_call_operand.vmem [shape: bf16[32,32], index: 3, kind: input, shape index: {}]
  %s4 = inlined_call_operand.vmem [shape: f32[1,32], index: 4, kind: input, shape index: {}]
  %s5 = inlined_call_operand.vmem [shape: bf16[32,64], index: 5, kind: input, shape index: {}]
  %s6 = inlined_call_operand.vmem [shape: f32[1,64], index: 6, kind: input, shape index: {}]
  %s7 = inlined_call_operand.vmem [shape: bf16[32,64], index: 7, kind: input, shape index: {}]
  %s8 = inlined_call_operand.vmem [shape: f32[1,64], index: 8, kind: input, shape index: {}]
  %s9 = inlined_call_operand.vmem [shape: bf16[32,4], index: 9, kind: input, shape index: {}]
  %s10 = inlined_call_operand.vmem [shape: bf16[4,32], index: 10, kind: input, shape index: {}]
  %s11 = inlined_call_operand.hbm [shape: f32[2,64], index: 11, kind: output, shape index: {}]
  %s12 = sld [smem:[#allocation0]]
  $region54: #{tpu_custom_call.1} parent=0
    _
  %s14 = ssub.s32 1, %s12
  %s15 = scalar_select 0, %s14, %s12
  $region1: #{tpu_custom_call.1} parent=0
    #allocation2 [shape = 'u8[1024]{0}', space=vmem, size = 0x400, scoped, tag = 'output window, operand 0, single buffered']
    #allocation3 [shape = 's32[1]{0}', space=sflag, size = 0x4, scoped, tag = 'scoped memory for tpu_custom_call.1']
    %16 = vsyncpa [#allocation3], 0
    // Predicated region
    $region2: #{tpu_custom_call.1} parent=1 // pred_check
      _
    $region3: #{tpu_custom_call.1} parent=1 // pred_check_branch
      %18 = sbr.rel (0) target = $region5
    $region4: #{tpu_custom_call.1} parent=1 // pred_region
      _
    $region5: #{tpu_custom_call.1} parent=1 // pred_fallthru
      _
    // Predicated region
    $region6: #{tpu_custom_call.1} parent=1 // pred_check
      _
    $region7: #{tpu_custom_call.1} parent=1 // pred_check_branch
      %20 = sbr.rel (0) target = $region9
    $region8: #{tpu_custom_call.1} parent=1 // pred_region
      _
    $region9: #{tpu_custom_call.1} parent=1 // pred_fallthru
      _
    // Predicated region
    $region10: #{tpu_custom_call.1} parent=1 // pred_check
      _
    $region11: #{tpu_custom_call.1} parent=1 // pred_check_branch
      %22 = sbr.rel (0) target = $region13
    $region12: #{tpu_custom_call.1} parent=1 // pred_region
      _
    $region13: #{tpu_custom_call.1} parent=1 // pred_fallthru
      _
    // Predicated region
    $region14: #{tpu_custom_call.1} parent=1 // pred_check
      _
    $region15: #{tpu_custom_call.1} parent=1 // pred_check_branch
      %24 = sbr.rel (0) target = $region17
    $region16: #{tpu_custom_call.1} parent=1 // pred_region
      _
    $region17: #{tpu_custom_call.1} parent=1 // pred_fallthru
      _
    // Predicated region
    $region18: #{tpu_custom_call.1} parent=1 // pred_check
      _
    $region19: #{tpu_custom_call.1} parent=1 // pred_check_branch
      %26 = sbr.rel (0) target = $region21
    $region20: #{tpu_custom_call.1} parent=1 // pred_region
      _
    $region21: #{tpu_custom_call.1} parent=1 // pred_fallthru
      _
    // Predicated region
    $region22: #{tpu_custom_call.1} parent=1 // pred_check
      _
    $region23: #{tpu_custom_call.1} parent=1 // pred_check_branch
      %28 = sbr.rel (0) target = $region25
    $region24: #{tpu_custom_call.1} parent=1 // pred_region
      _
    $region25: #{tpu_custom_call.1} parent=1 // pred_fallthru
      _
    // Predicated region
    $region26: #{tpu_custom_call.1} parent=1 // pred_check
      _
    $region27: #{tpu_custom_call.1} parent=1 // pred_check_branch
      %30 = sbr.rel (0) target = $region29
    $region28: #{tpu_custom_call.1} parent=1 // pred_region
      _
    $region29: #{tpu_custom_call.1} parent=1 // pred_fallthru
      _
    // Predicated region
    $region30: #{tpu_custom_call.1} parent=1 // pred_check
      _
    $region31: #{tpu_custom_call.1} parent=1 // pred_check_branch
      %32 = sbr.rel (0) target = $region33
    $region32: #{tpu_custom_call.1} parent=1 // pred_region
      _
    $region33: #{tpu_custom_call.1} parent=1 // pred_fallthru
      _
    // Predicated region
    $region34: #{tpu_custom_call.1} parent=1 // pred_check
      _
    $region35: #{tpu_custom_call.1} parent=1 // pred_check_branch
      %34 = sbr.rel (0) target = $region37
    $region36: #{tpu_custom_call.1} parent=1 // pred_region
      _
    $region37: #{tpu_custom_call.1} parent=1 // pred_fallthru
      _
    // Predicated region
    $region38: #{tpu_custom_call.1} parent=1 // pred_check
      _
    $region39: #{tpu_custom_call.1} parent=1 // pred_check_branch
      %36 = sbr.rel (0) target = $region41
    $region40: #{tpu_custom_call.1} parent=1 // pred_region
      _
    $region41: #{tpu_custom_call.1} parent=1 // pred_fallthru
      _
    // Predicated region
    $region42: #{tpu_custom_call.1} parent=1 // pred_check
      _
    $region43: #{tpu_custom_call.1} parent=1 // pred_check_branch
      %38 = sbr.rel (0) target = $region45
    $region44: #{tpu_custom_call.1} parent=1 // pred_region
      _
    $region45: #{tpu_custom_call.1} parent=1 // pred_fallthru
      _
    %v40 = vld [vmem:[%s0] sm:$0xf]
    %v41 = vld [vmem:[%s0 + $0x4] sm:$0xf]
    %v42 = vld [vmem:[%s0 + $0x8] sm:$0xf]
    %v43 = vld [vmem:[%s0 + $0xc] sm:$0xf]
    %v44 = vld [vmem:[%s0 + $0x10] sm:$0xf]
    %v45 = vld [vmem:[%s0 + $0x14] sm:$0xf]
    %v46 = vld [vmem:[%s0 + $0x18] sm:$0xf]
    %v47 = vld [vmem:[%s0 + $0x1c] sm:$0xf]
    %v48 = vld [vmem:[%s0 + $0x20] sm:$0xf]
    %v49 = vld [vmem:[%s0 + $0x24] sm:$0xf]
    %v50 = vld [vmem:[%s0 + $0x28] sm:$0xf]
    %v51 = vld [vmem:[%s0 + $0x2c] sm:$0xf]
    %v52 = vld [vmem:[%s0 + $0x30] sm:$0xf]
    %v53 = vld [vmem:[%s0 + $0x34] sm:$0xf]
    %v54 = vld [vmem:[%s0 + $0x38] sm:$0xf]
    %v55 = vld [vmem:[%s0 + $0x3c] sm:$0xf]
    %v56 = vunpack.c.l.bf16 %v40
    %v57 = vunpack.c.l.bf16 %v41
    %v58 = vunpack.c.l.bf16 %v42
    %v59 = vunpack.c.l.bf16 %v43
    %v60 = vunpack.c.l.bf16 %v44
    %v61 = vunpack.c.l.bf16 %v45
    %v62 = vunpack.c.l.bf16 %v46
    %v63 = vunpack.c.l.bf16 %v47
    %v64 = vunpack.c.l.bf16 %v48
    %v65 = vunpack.c.l.bf16 %v49
    %v66 = vunpack.c.l.bf16 %v50
    %v67 = vunpack.c.l.bf16 %v51
    %v68 = vunpack.c.l.bf16 %v52
    %v69 = vunpack.c.l.bf16 %v53
    %v70 = vunpack.c.l.bf16 %v54
    %v71 = vunpack.c.l.bf16 %v55
    %vm72 = vcmask 261120
    %v73 = vsel %vm72, %v56, 0.0
    %v74 = vsel %vm72, %v57, 0.0
    %v75 = vadd.f32 %v73, %v74
    %v76 = vsel %vm72, %v58, 0.0
    %v77 = vadd.f32 %v75, %v76
    %v78 = vsel %vm72, %v59, 0.0
    %v79 = vadd.f32 %v77, %v78
    %v80 = vsel %vm72, %v60, 0.0
    %v81 = vadd.f32 %v79, %v80
    %v82 = vsel %vm72, %v61, 0.0
    %v83 = vadd.f32 %v81, %v82
    %v84 = vsel %vm72, %v62, 0.0
    %v85 = vadd.f32 %v83, %v84
    %v86 = vsel %vm72, %v63, 0.0
    %v87 = vadd.f32 %v85, %v86
    %v88 = vrot.slane %v87, 4
    %v89 = vadd.f32 %v87, %v88
    %v90 = vrot.slane %v89, 2
    %v91 = vadd.f32 %v89, %v90
    %v92 = vrot.slane %v91, 1
    %v93 = vadd.f32 %v91, %v92
    %v94 = vsel %vm72, %v64, 0.0
    %v95 = vsel %vm72, %v65, 0.0
    %v96 = vadd.f32 %v94, %v95
    %v97 = vsel %vm72, %v66, 0.0
    %v98 = vadd.f32 %v96, %v97
    %v99 = vsel %vm72, %v67, 0.0
    %v100 = vadd.f32 %v98, %v99
    %v101 = vsel %vm72, %v68, 0.0
    %v102 = vadd.f32 %v100, %v101
    %v103 = vsel %vm72, %v69, 0.0
    %v104 = vadd.f32 %v102, %v103
    %v105 = vsel %vm72, %v70, 0.0
    %v106 = vadd.f32 %v104, %v105
    %v107 = vsel %vm72, %v71, 0.0
    %v108 = vadd.f32 %v106, %v107
    %v109 = vrot.slane %v108, 4
    %v110 = vadd.f32 %v108, %v109
    %v111 = vrot.slane %v110, 2
    %v112 = vadd.f32 %v110, %v111
    %v113 = vrot.slane %v112, 1
    %v114 = vadd.f32 %v112, %v113
    %v115 = vrcp.pop 64.0
    %v116 = vmul.f32 %v93, %v115
    %v117 = vmul.f32 %v114, %v115
    %v118 = vld [vmem:[%s1] sm:$0x1]
    %v119 = vunpack.c.l.bf16 %v118
    %v120 = vlaneseq
    %v121 = vshrl.u32 %v120, 7
    %v122 = vsub.s32 0, %v121
    %v123 = vrot.slane %v119, %v122
    %v124 = vadd.f32 %v116, %v123
    %v125 = vadd.f32 %v117, %v123
    %v126 = vpack.c.bf16 %v124, %v124
    %v127 = vpack.c.bf16 %v125, %v125
    %v128 = vld [vmem:[%s2] sm:$0xf]
    %v129 = vld [vmem:[%s2 + $0x4] sm:$0xf]
    %v130 = vld [vmem:[%s2 + $0x8] sm:$0xf]
    %v131 = vld [vmem:[%s2 + $0xc] sm:$0xf]
    %v132 = vld [vmem:[%s2 + $0x10] sm:$0xf]
    %v133 = vld [vmem:[%s2 + $0x14] sm:$0xf]
    %v134 = vld [vmem:[%s2 + $0x18] sm:$0xf]
    %v135 = vld [vmem:[%s2 + $0x1c] sm:$0xf]
    %v136 = vadd.bf16 %v40, %v128
    %v137 = vadd.bf16 %v41, %v129
    %v138 = vadd.bf16 %v42, %v130
    %v139 = vadd.bf16 %v43, %v131
    %v140 = vadd.bf16 %v44, %v132
    %v141 = vadd.bf16 %v45, %v133
    %v142 = vadd.bf16 %v46, %v134
    %v143 = vadd.bf16 %v47, %v135
    %v144 = vadd.bf16 %v48, %v128
    %v145 = vadd.bf16 %v49, %v129
    %v146 = vadd.bf16 %v50, %v130
    %v147 = vadd.bf16 %v51, %v131
    %v148 = vadd.bf16 %v52, %v132
    %v149 = vadd.bf16 %v53, %v133
    %v150 = vadd.bf16 %v54, %v134
    %v151 = vadd.bf16 %v55, %v135
    %v152 = vld [vmem:[%s5] sm:$0xf]
    %v153 = vld [vmem:[%s5 + $0x4] sm:$0xf]
    %v154 = vld [vmem:[%s5 + $0x8] sm:$0xf]
    %v155 = vld [vmem:[%s5 + $0xc] sm:$0xf]
    %v156 = vld [vmem:[%s6] sm:$0x1]
    %v158 = vlaneseq
    %v159 = vshrl.u32 %v158, 7
    %v160 = vsub.s32 0, %v159
    %v161 = vrot.slane %v156, %v160
    %v179 = vunpack.c.l.b16 %v136
    %v180 = vunpack.c.l.b16 %v137
    %v181 = vunpack.c.l.b16 %v138
    %v182 = vunpack.c.l.b16 %v139
    %v183 = vunpack.c.l.b16 %v140
    %v184 = vunpack.c.l.b16 %v141
    %v185 = vunpack.c.l.b16 %v142
    %v186 = vunpack.c.l.b16 %v143
    %v187 = vunpack.c.l.b16 %v144
    %v188 = vunpack.c.l.b16 %v145
    %v189 = vunpack.c.l.b16 %v146
    %v190 = vunpack.c.l.b16 %v147
    %v191 = vunpack.c.l.b16 %v148
    %v192 = vunpack.c.l.b16 %v149
    %v193 = vunpack.c.l.b16 %v150
    %v194 = vunpack.c.l.b16 %v151
    %v195 = vpack.c.b16 %v180, %v179
    %v196 = vpack.c.b16 %v182, %v181
    %v197 = vpack.c.b16 %v184, %v183
    %v198 = vpack.c.b16 %v186, %v185
    %v199 = vpack.c.b16 %v188, %v187
    %v200 = vpack.c.b16 %v190, %v189
    %v201 = vpack.c.b16 %v192, %v191
    %v202 = vpack.c.b16 %v194, %v193
    %v207 = vunpack.c.l.b16 %v152
    %v208 = vunpack.c.l.b16 %v153
    %v209 = vunpack.c.l.b16 %v154
    %v210 = vunpack.c.l.b16 %v155
    %v211 = vpack.c.b16 %v208, %v207
    %v212 = vpack.c.b16 %v210, %v209
    %v216 = vsel %vm72, %v195, 0
    %v219 = vsel %vm72, %v196, 0
    %v222 = vsel %vm72, %v197, 0
    %v225 = vsel %vm72, %v198, 0
    %v228 = vsel %vm72, %v199, 0
    %v231 = vsel %vm72, %v200, 0
    %v234 = vsel %vm72, %v201, 0
    %v237 = vsel %vm72, %v202, 0
    %239 = vmatprep.subr.bf16.mxu0 0
    %240 = vmatpush1.bf16.msra.mxu0 0
    %241 = vmatprep.subr.bf16.mxu0 0
    %242 = vmatpush1.bf16.msra.mxu0 0
    %243 = vmatprep.subr.bf16.mxu0 0
    %244 = vmatpush1.bf16.msra.mxu0 0
    %245 = vmatprep.subr.bf16.mxu0 0
    %246 = vmatpush1.bf16.msra.mxu0 0
    %247 = vmatprep.subr.bf16.mxu0 0
    %248 = vmatpush1.bf16.msra.mxu0 0
    %249 = vmatprep.subr.bf16.mxu0 0
    %250 = vmatpush1.bf16.msra.mxu0 0
    %251 = vmatprep.subr.bf16.mxu0 0
    %252 = vmatpush1.bf16.msra.mxu0 %v212
    %253 = vmatprep.subr.bf16.mxu0 0
    %254 = vmatpush1.bf16.msra.mxu0 %v211
    %255 = vmatprep.subr.bf16.mxu0 0
    %256 = vmatpush2.bf16.msra.mxu0 0
    %257 = vmatprep.subr.bf16.mxu0 0
    %258 = vmatpush2.bf16.msra.mxu0 0
    %259 = vmatprep.subr.bf16.mxu0 0
    %260 = vmatpush2.bf16.msra.mxu0 0
    %261 = vmatprep.subr.bf16.mxu0 0
    %262 = vmatpush2.bf16.msra.mxu0 0
    %263 = vmatprep.subr.bf16.mxu0 0
    %264 = vmatpush2.bf16.msra.mxu0 0
    %265 = vmatprep.subr.bf16.mxu0 0
    %266 = vmatpush2.bf16.msra.mxu0 0
    %267 = vmatprep.subr.bf16.mxu0 0
    %268 = vmatpush2.bf16.msra.mxu0 0
    %269 = vmatprep.subr.bf16.mxu0 0
    %270 = vmatpush2.bf16.msra.mxu0 0
    %271 = vmatprep.mubr.bf16.mxu0 0
    %272 = vmatmul.mubr.bf16.gmra.mxu0 %v216
    %v273 = vpop.f32.mrf.mxu0
    %v274 = vadd.f32 %v161, %v273
    %v275 = vpop.f32.mrf.mxu0
    %v276 = vpop.f32.mrf.mxu0
    %v277 = vadd.f32 %v161, %v276
    %v278 = vpop.f32.mrf.mxu0
    %279 = vmatprep.mubr.bf16.mxu0 0
    %280 = vmatmul.mubr.bf16.gmra.mxu0 %v219
    %v281 = vpop.f32.mrf.mxu0
    %v282 = vadd.f32 %v161, %v281
    %v283 = vpop.f32.mrf.mxu0
    %v284 = vpop.f32.mrf.mxu0
    %v285 = vadd.f32 %v161, %v284
    %v286 = vpop.f32.mrf.mxu0
    %287 = vmatprep.mubr.bf16.mxu0 0
    %288 = vmatmul.mubr.bf16.gmra.mxu0 %v222
    %v289 = vpop.f32.mrf.mxu0
    %v290 = vadd.f32 %v161, %v289
    %v291 = vpop.f32.mrf.mxu0
    %v292 = vpop.f32.mrf.mxu0
    %v293 = vadd.f32 %v161, %v292
    %v294 = vpop.f32.mrf.mxu0
    %295 = vmatprep.mubr.bf16.mxu0 0
    %296 = vmatmul.mubr.bf16.gmra.mxu0 %v225
    %v297 = vpop.f32.mrf.mxu0
    %v298 = vadd.f32 %v161, %v297
    %v299 = vpop.f32.mrf.mxu0
    %v300 = vpop.f32.mrf.mxu0
    %v301 = vadd.f32 %v161, %v300
    %v302 = vpop.f32.mrf.mxu0
    %303 = vmatprep.mubr.bf16.mxu0 0
    %304 = vmatmul.mubr.bf16.gmra.mxu0 %v228
    %v305 = vpop.f32.mrf.mxu0
    %v306 = vadd.f32 %v161, %v305
    %v307 = vpop.f32.mrf.mxu0
    %v308 = vpop.f32.mrf.mxu0
    %v309 = vadd.f32 %v161, %v308
    %v310 = vpop.f32.mrf.mxu0
    %311 = vmatprep.mubr.bf16.mxu0 0
    %312 = vmatmul.mubr.bf16.gmra.mxu0 %v231
    %v313 = vpop.f32.mrf.mxu0
    %v314 = vadd.f32 %v161, %v313
    %v315 = vpop.f32.mrf.mxu0
    %v316 = vpop.f32.mrf.mxu0
    %v317 = vadd.f32 %v161, %v316
    %v318 = vpop.f32.mrf.mxu0
    %319 = vmatprep.mubr.bf16.mxu0 0
    %320 = vmatmul.mubr.bf16.gmra.mxu0 %v234
    %v321 = vpop.f32.mrf.mxu0
    %v322 = vadd.f32 %v161, %v321
    %v323 = vpop.f32.mrf.mxu0
    %v324 = vpop.f32.mrf.mxu0
    %v325 = vadd.f32 %v161, %v324
    %v326 = vpop.f32.mrf.mxu0
    %327 = vmatprep.mubr.bf16.mxu0 0
    %328 = vmatmul.mubr.bf16.gmra.mxu0 %v237
    %v329 = vpop.f32.mrf.mxu0
    %v330 = vadd.f32 %v161, %v329
    %v331 = vpop.f32.mrf.mxu0
    %v332 = vpop.f32.mrf.mxu0
    %v333 = vadd.f32 %v161, %v332
    %v334 = vpop.f32.mrf.mxu0
    %335 = vdwg.mxu0
    %v336 = vld [vmem:[%s3] sm:$0xf]
    %v337 = vld [vmem:[%s3 + $0x4] sm:$0xf]
    %v338 = vld [vmem:[%s3 + $0x8] sm:$0xf]
    %v339 = vld [vmem:[%s3 + $0xc] sm:$0xf]
    %v340 = vld [vmem:[%s4] sm:$0x1]
    %v342 = vlaneseq
    %v343 = vshrl.u32 %v342, 7
    %v344 = vsub.s32 0, %v343
    %v345 = vrot.slane %v340, %v344
    %v349 = vunpack.c.l.b16 %v126
    %v350 = vunpack.c.l.b16 %v127
    %v351 = vrot.slane %v350, 7
    %vm352 = vcmask 1041409
    %v353 = vsel %vm352, %v351, %v349
    %v354 = vpack.c.b16 %v353, %v353
    %v359 = vunpack.c.l.b16 %v336
    %v360 = vunpack.c.l.b16 %v337
    %v361 = vunpack.c.l.b16 %v338
    %v362 = vunpack.c.l.b16 %v339
    %v363 = vpack.c.b16 %v360, %v359
    %v364 = vpack.c.b16 %v362, %v361
    %v368 = vsel %vm72, %v354, 0
    %370 = vmatprep.subr.bf16.mxu0 0
    %371 = vmatpush1.bf16.msra.mxu0 0
    %372 = vmatprep.subr.bf16.mxu0 0
    %373 = vmatpush1.bf16.msra.mxu0 0
    %374 = vmatprep.subr.bf16.mxu0 0
    %375 = vmatpush1.bf16.msra.mxu0 0
    %376 = vmatprep.subr.bf16.mxu0 0
    %377 = vmatpush1.bf16.msra.mxu0 0
    %378 = vmatprep.subr.bf16.mxu0 0
    %379 = vmatpush1.bf16.msra.mxu0 0
    %380 = vmatprep.subr.bf16.mxu0 0
    %381 = vmatpush1.bf16.msra.mxu0 0
    %382 = vmatprep.subr.bf16.mxu0 0
    %383 = vmatpush1.bf16.msra.mxu0 %v364
    %384 = vmatprep.subr.bf16.mxu0 0
    %385 = vmatpush1.bf16.msra.mxu0 %v363
    %386 = vmatprep.subr.bf16.mxu0 0
    %387 = vmatpush2.bf16.msra.mxu0 0
    %388 = vmatprep.subr.bf16.mxu0 0
    %389 = vmatpush2.bf16.msra.mxu0 0
    %390 = vmatprep.subr.bf16.mxu0 0
    %391 = vmatpush2.bf16.msra.mxu0 0
    %392 = vmatprep.subr.bf16.mxu0 0
    %393 = vmatpush2.bf16.msra.mxu0 0
    %394 = vmatprep.subr.bf16.mxu0 0
    %395 = vmatpush2.bf16.msra.mxu0 0
    %396 = vmatprep.subr.bf16.mxu0 0
    %397 = vmatpush2.bf16.msra.mxu0 0
    %398 = vmatprep.subr.bf16.mxu0 0
    %399 = vmatpush2.bf16.msra.mxu0 0
    %400 = vmatprep.subr.bf16.mxu0 0
    %401 = vmatpush2.bf16.msra.mxu0 0
    %402 = vmatprep.mubr.bf16.mxu0 0
    %403 = vmatmul.mubr.bf16.gmra.mxu0 %v368
    %v404 = vpop.f32.mrf.mxu0
    %v405 = vadd.f32 %v345, %v404
    %v406 = vpop.f32.mrf.mxu0
    %v407 = vpop.f32.mrf.mxu0
    %v408 = vpop.f32.mrf.mxu0
    %409 = vdwg.mxu0
    %v410 = vmul.f32 %v405, 0.35355338
    %411 = vmatprep.subr.bf16.mxu0 0
    %412 = vmatpush1.bf16.msra.mxu0 0
    %413 = vmatprep.subr.bf16.mxu0 0
    %414 = vmatpush1.bf16.msra.mxu0 0
    %415 = vmatprep.subr.bf16.mxu0 0
    %416 = vmatpush1.bf16.msra.mxu0 0
    %417 = vmatprep.subr.bf16.mxu0 0
    %418 = vmatpush1.bf16.msra.mxu0 0
    %419 = vmatprep.subr.bf16.mxu0 0
    %420 = vmatpush1.bf16.msra.mxu0 0
    %421 = vmatprep.subr.bf16.mxu0 0
    %422 = vmatpush1.bf16.msra.mxu0 0
    %423 = vmatprep.subr.bf16.mxu0 0
    %424 = vmatpush1.bf16.msra.mxu0 %v212
    %425 = vmatprep.subr.bf16.mxu0 0
    %426 = vmatpush1.bf16.msra.mxu0 %v211
    %427 = vmatprep.subr.bf16.mxu0 0
    %428 = vmatpush2.bf16.msra.mxu0 0
    %429 = vmatprep.subr.bf16.mxu0 0
    %430 = vmatpush2.bf16.msra.mxu0 0
    %431 = vmatprep.subr.bf16.mxu0 0
    %432 = vmatpush2.bf16.msra.mxu0 0
    %433 = vmatprep.subr.bf16.mxu0 0
    %434 = vmatpush2.bf16.msra.mxu0 0
    %435 = vmatprep.subr.bf16.mxu0 0
    %436 = vmatpush2.bf16.msra.mxu0 0
    %437 = vmatprep.subr.bf16.mxu0 0
    %438 = vmatpush2.bf16.msra.mxu0 0
    %439 = vmatprep.subr.bf16.mxu0 0
    %440 = vmatpush2.bf16.msra.mxu0 0
    %441 = vmatprep.subr.bf16.mxu0 0
    %442 = vmatpush2.bf16.msra.mxu0 0
    %443 = vmatprep.mubr.bf16.mxu0 0
    %444 = vmatmul.mubr.bf16.gmra.mxu0 %v368
    %v445 = vpop.f32.mrf.mxu0
    %v446 = vadd.f32 %v161, %v445
    %v447 = vpop.f32.mrf.mxu0
    %v448 = vpop.f32.mrf.mxu0
    %v449 = vpop.f32.mrf.mxu0
    %450 = vdwg.mxu0
    %v453 = vunpack.c.l.s4 1966171168
    %v454 = vunpack.c.0.s8 %v453
    %v455 = vlaneseq
    %v456 = vshrl.u32 %v455, 7
    %v457 = vsub.s32 %v454, %v456
    %v458 = vrot.slane %v410, %v457
    %v459 = vcombine.high %v458, %v458
    %v461 = vunpack.c.l.s4 1966171168
    %v462 = vunpack.c.0.s8 %v461
    %v463 = vlaneseq
    %v464 = vshrl.u32 %v463, 7
    %v465 = vsub.s32 %v462, %v464
    %v466 = vrot.slane %v458, %v465
    %v468 = vunpack.c.l.s4 1966171168
    %v469 = vunpack.c.0.s8 %v468
    %v470 = vlaneseq
    %v471 = vshrl.u32 %v470, 7
    %v472 = vsub.s32 %v469, %v471
    %v473 = vrot.slane %v459, %v472
    %v474 = vlaneseq
    %v475 = vshrl.u32 %v474, 7
    %v476 = vsub.s32 0, %v475
    %v477 = vrot.slane %v466, %v476
    %v478 = vlaneseq
    %v479 = vshrl.u32 %v478, 7
    %v480 = vsub.s32 0, %v479
    %v481 = vrot.slane %v473, %v480
    %v484 = vmul.f32 %v274, %v477
    %v485 = vmul.f32 %v277, %v477
    %v486 = vmul.f32 %v282, %v477
    %v487 = vmul.f32 %v285, %v477
    %v488 = vmul.f32 %v290, %v477
    %v489 = vmul.f32 %v293, %v477
    %v490 = vmul.f32 %v298, %v477
    %v491 = vmul.f32 %v301, %v477
    %v492 = vmul.f32 %v306, %v481
    %v493 = vmul.f32 %v309, %v481
    %v494 = vmul.f32 %v314, %v481
    %v495 = vmul.f32 %v317, %v481
    %v496 = vmul.f32 %v322, %v481
    %v497 = vmul.f32 %v325, %v481
    %v498 = vmul.f32 %v330, %v481
    %v499 = vmul.f32 %v333, %v481
    %v500 = vpack.c.bf16 %v485, %v484
    %v501 = vpack.c.bf16 %v487, %v486
    %v502 = vpack.c.bf16 %v489, %v488
    %v503 = vpack.c.bf16 %v491, %v490
    %v504 = vpack.c.bf16 %v493, %v492
    %v505 = vpack.c.bf16 %v495, %v494
    %v506 = vpack.c.bf16 %v497, %v496
    %v507 = vpack.c.bf16 %v499, %v498
    %v508 = vld [vmem:[%s9] sm:$0xf]
    %v509 = vld [vmem:[%s9 + $0x4] sm:$0xf]
    %v510 = vld [vmem:[%s9 + $0x8] sm:$0xf]
    %v511 = vld [vmem:[%s9 + $0xc] sm:$0xf]
    %v516 = vunpack.c.l.b16 %v508
    %v517 = vunpack.c.l.b16 %v509
    %v518 = vunpack.c.l.b16 %v510
    %v519 = vunpack.c.l.b16 %v511
    %v520 = vpack.c.b16 %v517, %v516
    %v521 = vpack.c.b16 %v519, %v518
    %v525 = vsel %vm72, %v500, 0
    %v528 = vsel %vm72, %v501, 0
    %v531 = vsel %vm72, %v502, 0
    %v534 = vsel %vm72, %v503, 0
    %v537 = vsel %vm72, %v504, 0
    %v540 = vsel %vm72, %v505, 0
    %v543 = vsel %vm72, %v506, 0
    %v546 = vsel %vm72, %v507, 0
    %548 = vmatprep.subr.bf16.mxu0 0
    %549 = vmatpush1.bf16.msra.mxu0 0
    %550 = vmatprep.subr.bf16.mxu0 0
    %551 = vmatpush1.bf16.msra.mxu0 0
    %552 = vmatprep.subr.bf16.mxu0 0
    %553 = vmatpush1.bf16.msra.mxu0 0
    %554 = vmatprep.subr.bf16.mxu0 0
    %555 = vmatpush1.bf16.msra.mxu0 0
    %556 = vmatprep.subr.bf16.mxu0 0
    %557 = vmatpush1.bf16.msra.mxu0 0
    %558 = vmatprep.subr.bf16.mxu0 0
    %559 = vmatpush1.bf16.msra.mxu0 0
    %560 = vmatprep.subr.bf16.mxu0 0
    %561 = vmatpush1.bf16.msra.mxu0 %v521
    %562 = vmatprep.subr.bf16.mxu0 0
    %563 = vmatpush1.bf16.msra.mxu0 %v520
    %564 = vmatprep.subr.bf16.mxu0 0
    %565 = vmatpush2.bf16.msra.mxu0 0
    %566 = vmatprep.subr.bf16.mxu0 0
    %567 = vmatpush2.bf16.msra.mxu0 0
    %568 = vmatprep.subr.bf16.mxu0 0
    %569 = vmatpush2.bf16.msra.mxu0 0
    %570 = vmatprep.subr.bf16.mxu0 0
    %571 = vmatpush2.bf16.msra.mxu0 0
    %572 = vmatprep.subr.bf16.mxu0 0
    %573 = vmatpush2.bf16.msra.mxu0 0
    %574 = vmatprep.subr.bf16.mxu0 0
    %575 = vmatpush2.bf16.msra.mxu0 0
    %576 = vmatprep.subr.bf16.mxu0 0
    %577 = vmatpush2.bf16.msra.mxu0 0
    %578 = vmatprep.subr.bf16.mxu0 0
    %579 = vmatpush2.bf16.msra.mxu0 0
    %580 = vmatprep.mubr.bf16.mxu0 0
    %581 = vmatmul.mubr.bf16.gmra.mxu0 %v525
    %v582 = vpop.f32.mrf.mxu0
    %v583 = vadd.f32 0.0, %v582
    %v584 = vpop.f32.mrf.mxu0
    %v585 = vpop.f32.mrf.mxu0
    %v586 = vadd.f32 0.0, %v585
    %v587 = vpop.f32.mrf.mxu0
    %588 = vmatprep.mubr.bf16.mxu0 0
    %589 = vmatmul.mubr.bf16.gmra.mxu0 %v528
    %v590 = vpop.f32.mrf.mxu0
    %v591 = vadd.f32 0.0, %v590
    %v592 = vpop.f32.mrf.mxu0
    %v593 = vpop.f32.mrf.mxu0
    %v594 = vadd.f32 0.0, %v593
    %v595 = vpop.f32.mrf.mxu0
    %596 = vmatprep.mubr.bf16.mxu0 0
    %597 = vmatmul.mubr.bf16.gmra.mxu0 %v531
    %v598 = vpop.f32.mrf.mxu0
    %v599 = vadd.f32 0.0, %v598
    %v600 = vpop.f32.mrf.mxu0
    %v601 = vpop.f32.mrf.mxu0
    %v602 = vadd.f32 0.0, %v601
    %v603 = vpop.f32.mrf.mxu0
    %604 = vmatprep.mubr.bf16.mxu0 0
    %605 = vmatmul.mubr.bf16.gmra.mxu0 %v534
    %v606 = vpop.f32.mrf.mxu0
    %v607 = vadd.f32 0.0, %v606
    %v608 = vpop.f32.mrf.mxu0
    %v609 = vpop.f32.mrf.mxu0
    %v610 = vadd.f32 0.0, %v609
    %v611 = vpop.f32.mrf.mxu0
    %612 = vmatprep.mubr.bf16.mxu0 0
    %613 = vmatmul.mubr.bf16.gmra.mxu0 %v537
    %v614 = vpop.f32.mrf.mxu0
    %v615 = vadd.f32 0.0, %v614
    %v616 = vpop.f32.mrf.mxu0
    %v617 = vpop.f32.mrf.mxu0
    %v618 = vadd.f32 0.0, %v617
    %v619 = vpop.f32.mrf.mxu0
    %620 = vmatprep.mubr.bf16.mxu0 0
    %621 = vmatmul.mubr.bf16.gmra.mxu0 %v540
    %v622 = vpop.f32.mrf.mxu0
    %v623 = vadd.f32 0.0, %v622
    %v624 = vpop.f32.mrf.mxu0
    %v625 = vpop.f32.mrf.mxu0
    %v626 = vadd.f32 0.0, %v625
    %v627 = vpop.f32.mrf.mxu0
    %628 = vmatprep.mubr.bf16.mxu0 0
    %629 = vmatmul.mubr.bf16.gmra.mxu0 %v543
    %v630 = vpop.f32.mrf.mxu0
    %v631 = vadd.f32 0.0, %v630
    %v632 = vpop.f32.mrf.mxu0
    %v633 = vpop.f32.mrf.mxu0
    %v634 = vadd.f32 0.0, %v633
    %v635 = vpop.f32.mrf.mxu0
    %636 = vmatprep.mubr.bf16.mxu0 0
    %637 = vmatmul.mubr.bf16.gmra.mxu0 %v546
    %v638 = vpop.f32.mrf.mxu0
    %v639 = vadd.f32 0.0, %v638
    %v640 = vpop.f32.mrf.mxu0
    %v641 = vpop.f32.mrf.mxu0
    %v642 = vadd.f32 0.0, %v641
    %v643 = vpop.f32.mrf.mxu0
    %644 = vdwg.mxu0
    %v645 = vmul.f32 %v446, %v410
    %v646 = vpack.c.bf16 %v645, %v645
    %v648 = vsel %vm72, %v646, 0
    %650 = vmatprep.subr.bf16.mxu0 0
    %651 = vmatpush1.bf16.msra.mxu0 0
    %652 = vmatprep.subr.bf16.mxu0 0
    %653 = vmatpush1.bf16.msra.mxu0 0
    %654 = vmatprep.subr.bf16.mxu0 0
    %655 = vmatpush1.bf16.msra.mxu0 0
    %656 = vmatprep.subr.bf16.mxu0 0
    %657 = vmatpush1.bf16.msra.mxu0 0
    %658 = vmatprep.subr.bf16.mxu0 0
    %659 = vmatpush1.bf16.msra.mxu0 0
    %660 = vmatprep.subr.bf16.mxu0 0
    %661 = vmatpush1.bf16.msra.mxu0 0
    %662 = vmatprep.subr.bf16.mxu0 0
    %663 = vmatpush1.bf16.msra.mxu0 %v521
    %664 = vmatprep.subr.bf16.mxu0 0
    %665 = vmatpush1.bf16.msra.mxu0 %v520
    %666 = vmatprep.subr.bf16.mxu0 0
    %667 = vmatpush2.bf16.msra.mxu0 0
    %668 = vmatprep.subr.bf16.mxu0 0
    %669 = vmatpush2.bf16.msra.mxu0 0
    %670 = vmatprep.subr.bf16.mxu0 0
    %671 = vmatpush2.bf16.msra.mxu0 0
    %672 = vmatprep.subr.bf16.mxu0 0
    %673 = vmatpush2.bf16.msra.mxu0 0
    %674 = vmatprep.subr.bf16.mxu0 0
    %675 = vmatpush2.bf16.msra.mxu0 0
    %676 = vmatprep.subr.bf16.mxu0 0
    %677 = vmatpush2.bf16.msra.mxu0 0
    %678 = vmatprep.subr.bf16.mxu0 0
    %679 = vmatpush2.bf16.msra.mxu0 0
    %680 = vmatprep.subr.bf16.mxu0 0
    %681 = vmatpush2.bf16.msra.mxu0 0
    %682 = vmatprep.mubr.bf16.mxu0 0
    %683 = vmatmul.mubr.bf16.gmra.mxu0 %v648
    %v684 = vpop.f32.mrf.mxu0
    %v685 = vadd.f32 0.0, %v684
    %v686 = vpop.f32.mrf.mxu0
    %v687 = vpop.f32.mrf.mxu0
    %v688 = vpop.f32.mrf.mxu0
    %689 = vdwg.mxu0
    %vm690 = vcmask 31744
    %v691 = vsel %vm690, %v583, -inf
    %v692 = vsel %vm690, %v586, -inf
    %v693 = vsel %vm690, %v591, -inf
    %v694 = vmax.f32 %v691, %v693
    %v695 = vsel %vm690, %v594, -inf
    %v696 = vmax.f32 %v692, %v695
    %v697 = vsel %vm690, %v599, -inf
    %v698 = vmax.f32 %v694, %v697
    %v699 = vsel %vm690, %v602, -inf
    %v700 = vmax.f32 %v696, %v699
    %v701 = vsel %vm690, %v607, -inf
    %v702 = vmax.f32 %v698, %v701
    %v703 = vsel %vm690, %v610, -inf
    %v704 = vmax.f32 %v700, %v703
    %v705 = vmax.f32 %v702, %v704
    %v706 = vrot.slane %v705, 4
    %v707 = vmax.f32 %v705, %v706
    %v708 = vrot.slane %v707, 2
    %v709 = vmax.f32 %v707, %v708
    %v710 = vrot.slane %v709, 1
    %v711 = vmax.f32 %v709, %v710
    %v712 = vsel %vm690, %v615, -inf
    %v713 = vsel %vm690, %v618, -inf
    %v714 = vsel %vm690, %v623, -inf
    %v715 = vmax.f32 %v712, %v714
    %v716 = vsel %vm690, %v626, -inf
    %v717 = vmax.f32 %v713, %v716
    %v718 = vsel %vm690, %v631, -inf
    %v719 = vmax.f32 %v715, %v718
    %v720 = vsel %vm690, %v634, -inf
    %v721 = vmax.f32 %v717, %v720
    %v722 = vsel %vm690, %v639, -inf
    %v723 = vmax.f32 %v719, %v722
    %v724 = vsel %vm690, %v642, -inf
    %v725 = vmax.f32 %v721, %v724
    %v726 = vmax.f32 %v723, %v725
    %v727 = vrot.slane %v726, 4
    %v728 = vmax.f32 %v726, %v727
    %v729 = vrot.slane %v728, 2
    %v730 = vmax.f32 %v728, %v729
    %v731 = vrot.slane %v730, 1
    %v732 = vmax.f32 %v730, %v731
    %v734 = vrot.slane %v685, 1
    %v737 = vmax.f32 %v711, %v685
    %v738 = vmax.f32 %v732, %v734
    %v739 = vlaneseq
    %v740 = vshrl.u32 %v739, 7
    %v741 = vsub.s32 0, %v740
    %v742 = vrot.slane %v737, %v741
    %v743 = vlaneseq
    %v744 = vshrl.u32 %v743, 7
    %v745 = vsub.s32 0, %v744
    %v746 = vrot.slane %v738, %v745
    %v747 = vsub.f32 %v583, %v742
    %v748 = vsub.f32 %v586, %v742
    %v749 = vsub.f32 %v591, %v742
    %v750 = vsub.f32 %v594, %v742
    %v751 = vsub.f32 %v599, %v742
    %v752 = vsub.f32 %v602, %v742
    %v753 = vsub.f32 %v607, %v742
    %v754 = vsub.f32 %v610, %v742
    %v755 = vsub.f32 %v615, %v746
    %v756 = vsub.f32 %v618, %v746
    %v757 = vsub.f32 %v623, %v746
    %v758 = vsub.f32 %v626, %v746
    %v759 = vsub.f32 %v631, %v746
    %v760 = vsub.f32 %v634, %v746
    %v761 = vsub.f32 %v639, %v746
    %v762 = vsub.f32 %v642, %v746
    %v763 = vmul.f32 %v747, 1.442695
    %v764 = vpow.pop %v763
    %v765 = vmul.f32 %v748, 1.442695
    %v766 = vpow.pop %v765
    %v767 = vmul.f32 %v749, 1.442695
    %v768 = vpow.pop %v767
    %v769 = vmul.f32 %v750, 1.442695
    %v770 = vpow.pop %v769
    %v771 = vmul.f32 %v751, 1.442695
    %v772 = vpow.pop %v771
    %v773 = vmul.f32 %v752, 1.442695
    %v774 = vpow.pop %v773
    %v775 = vmul.f32 %v753, 1.442695
    %v776 = vpow.pop %v775
    %v777 = vmul.f32 %v754, 1.442695
    %v778 = vpow.pop %v777
    %v779 = vmul.f32 %v755, 1.442695
    %v780 = vpow.pop %v779
    %v781 = vmul.f32 %v756, 1.442695
    %v782 = vpow.pop %v781
    %v783 = vmul.f32 %v757, 1.442695
    %v784 = vpow.pop %v783
    %v785 = vmul.f32 %v758, 1.442695
    %v786 = vpow.pop %v785
    %v787 = vmul.f32 %v759, 1.442695
    %v788 = vpow.pop %v787
    %v789 = vmul.f32 %v760, 1.442695
    %v790 = vpow.pop %v789
    %v791 = vmul.f32 %v761, 1.442695
    %v792 = vpow.pop %v791
    %v793 = vmul.f32 %v762, 1.442695
    %v794 = vpow.pop %v793
    %v797 = vrot.slane %v738, 7
    %v798 = vsel %vm352, %v797, %v737
    %v800 = vsub.f32 %v685, %v798
    %v801 = vmul.f32 %v800, 1.442695
    %v802 = vpow.pop %v801
    %v803 = vsel %vm690, %v764, 0.0
    %v804 = vsel %vm690, %v766, 0.0
    %v805 = vadd.f32 %v803, %v804
    %v806 = vsel %vm690, %v768, 0.0
    %v807 = vadd.f32 %v805, %v806
    %v808 = vsel %vm690, %v770, 0.0
    %v809 = vadd.f32 %v807, %v808
    %v810 = vsel %vm690, %v772, 0.0
    %v811 = vadd.f32 %v809, %v810
    %v812 = vsel %vm690, %v774, 0.0
    %v813 = vadd.f32 %v811, %v812
    %v814 = vsel %vm690, %v776, 0.0
    %v815 = vadd.f32 %v813, %v814
    %v816 = vsel %vm690, %v778, 0.0
    %v817 = vadd.f32 %v815, %v816
    %v818 = vrot.slane %v817, 4
    %v819 = vadd.f32 %v817, %v818
    %v820 = vrot.slane %v819, 2
    %v821 = vadd.f32 %v819, %v820
    %v822 = vrot.slane %v821, 1
    %v823 = vadd.f32 %v821, %v822
    %v824 = vsel %vm690, %v780, 0.0
    %v825 = vsel %vm690, %v782, 0.0
    %v826 = vadd.f32 %v824, %v825
    %v827 = vsel %vm690, %v784, 0.0
    %v828 = vadd.f32 %v826, %v827
    %v829 = vsel %vm690, %v786, 0.0
    %v830 = vadd.f32 %v828, %v829
    %v831 = vsel %vm690, %v788, 0.0
    %v832 = vadd.f32 %v830, %v831
    %v833 = vsel %vm690, %v790, 0.0
    %v834 = vadd.f32 %v832, %v833
    %v835 = vsel %vm690, %v792, 0.0
    %v836 = vadd.f32 %v834, %v835
    %v837 = vsel %vm690, %v794, 0.0
    %v838 = vadd.f32 %v836, %v837
    %v839 = vrot.slane %v838, 4
    %v840 = vadd.f32 %v838, %v839
    %v841 = vrot.slane %v840, 2
    %v842 = vadd.f32 %v840, %v841
    %v843 = vrot.slane %v842, 1
    %v844 = vadd.f32 %v842, %v843
    %v846 = vrot.slane %v802, 1
    %v849 = vadd.f32 %v823, %v802
    %v850 = vadd.f32 %v844, %v846
    %v851 = vrcp.pop %v849
    %v852 = vmul.f32 1.0, %v851
    %v853 = vrcp.pop %v850
    %v854 = vmul.f32 1.0, %v853
    %v855 = vlaneseq
    %v856 = vshrl.u32 %v855, 7
    %v857 = vsub.s32 0, %v856
    %v858 = vrot.slane %v852, %v857
    %v859 = vlaneseq
    %v860 = vshrl.u32 %v859, 7
    %v861 = vsub.s32 0, %v860
    %v862 = vrot.slane %v854, %v861
    %v863 = vmul.f32 %v764, %v858
    %v864 = vmul.f32 %v766, %v858
    %v865 = vmul.f32 %v768, %v858
    %v866 = vmul.f32 %v770, %v858
    %v867 = vmul.f32 %v772, %v858
    %v868 = vmul.f32 %v774, %v858
    %v869 = vmul.f32 %v776, %v858
    %v870 = vmul.f32 %v778, %v858
    %v871 = vmul.f32 %v780, %v862
    %v872 = vmul.f32 %v782, %v862
    %v873 = vmul.f32 %v784, %v862
    %v874 = vmul.f32 %v786, %v862
    %v875 = vmul.f32 %v788, %v862
    %v876 = vmul.f32 %v790, %v862
    %v877 = vmul.f32 %v792, %v862
    %v878 = vmul.f32 %v794, %v862
    %v881 = vrot.slane %v854, 7
    %v882 = vsel %vm352, %v881, %v852
    %v884 = vmul.f32 %v802, %v882
    %v885 = vpack.c.bf16 %v864, %v863
    %v886 = vpack.c.bf16 %v866, %v865
    %v887 = vpack.c.bf16 %v868, %v867
    %v888 = vpack.c.bf16 %v870, %v869
    %v889 = vpack.c.bf16 %v872, %v871
    %v890 = vpack.c.bf16 %v874, %v873
    %v891 = vpack.c.bf16 %v876, %v875
    %v892 = vpack.c.bf16 %v878, %v877
    %v893 = vld [vmem:[%s10] sm:$0x3]
    %v895 = vsel %vm690, %v885, 0
    %v898 = vsel %vm690, %v886, 0
    %v901 = vsel %vm690, %v887, 0
    %v904 = vsel %vm690, %v888, 0
    %v907 = vsel %vm690, %v889, 0
    %v910 = vsel %vm690, %v890, 0
    %v913 = vsel %vm690, %v891, 0
    %v916 = vsel %vm690, %v892, 0
    %vm918 = vcmask 1041408
    %v920 = vsel %vm918, %v893, 0
    %922 = vmatprep.subr.bf16.mxu0 0
    %923 = vmatpush1.bf16.msra.mxu0 0
    %924 = vmatprep.subr.bf16.mxu0 0
    %925 = vmatpush1.bf16.msra.mxu0 0
    %926 = vmatprep.subr.bf16.mxu0 0
    %927 = vmatpush1.bf16.msra.mxu0 0
    %928 = vmatprep.subr.bf16.mxu0 0
    %929 = vmatpush1.bf16.msra.mxu0 0
    %930 = vmatprep.subr.bf16.mxu0 0
    %931 = vmatpush1.bf16.msra.mxu0 0
    %932 = vmatprep.subr.bf16.mxu0 0
    %933 = vmatpush1.bf16.msra.mxu0 0
    %934 = vmatprep.subr.bf16.mxu0 0
    %935 = vmatpush1.bf16.msra.mxu0 0
    %936 = vmatprep.subr.bf16.mxu0 0
    %937 = vmatpush1.bf16.msra.mxu0 %v920
    %938 = vmatprep.subr.bf16.mxu0 0
    %939 = vmatpush2.bf16.msra.mxu0 0
    %940 = vmatprep.subr.bf16.mxu0 0
    %941 = vmatpush2.bf16.msra.mxu0 0
    %942 = vmatprep.subr.bf16.mxu0 0
    %943 = vmatpush2.bf16.msra.mxu0 0
    %944 = vmatprep.subr.bf16.mxu0 0
    %945 = vmatpush2.bf16.msra.mxu0 0
    %946 = vmatprep.subr.bf16.mxu0 0
    %947 = vmatpush2.bf16.msra.mxu0 0
    %948 = vmatprep.subr.bf16.mxu0 0
    %949 = vmatpush2.bf16.msra.mxu0 0
    %950 = vmatprep.subr.bf16.mxu0 0
    %951 = vmatpush2.bf16.msra.mxu0 0
    %952 = vmatprep.subr.bf16.mxu0 0
    %953 = vmatpush2.bf16.msra.mxu0 0
    %954 = vmatprep.mubr.bf16.mxu0 0
    %955 = vmatmul.mubr.bf16.gmra.mxu0 %v895
    %v956 = vpop.f32.mrf.mxu0
    %v957 = vadd.f32 0.0, %v956
    %v958 = vpop.f32.mrf.mxu0
    %v959 = vpop.f32.mrf.mxu0
    %v960 = vadd.f32 0.0, %v959
    %v961 = vpop.f32.mrf.mxu0
    %962 = vmatprep.mubr.bf16.mxu0 0
    %963 = vmatmul.mubr.bf16.gmra.mxu0 %v898
    %v964 = vpop.f32.mrf.mxu0
    %v965 = vadd.f32 0.0, %v964
    %v966 = vpop.f32.mrf.mxu0
    %v967 = vpop.f32.mrf.mxu0
    %v968 = vadd.f32 0.0, %v967
    %v969 = vpop.f32.mrf.mxu0
    %970 = vmatprep.mubr.bf16.mxu0 0
    %971 = vmatmul.mubr.bf16.gmra.mxu0 %v901
    %v972 = vpop.f32.mrf.mxu0
    %v973 = vadd.f32 0.0, %v972
    %v974 = vpop.f32.mrf.mxu0
    %v975 = vpop.f32.mrf.mxu0
    %v976 = vadd.f32 0.0, %v975
    %v977 = vpop.f32.mrf.mxu0
    %978 = vmatprep.mubr.bf16.mxu0 0
    %979 = vmatmul.mubr.bf16.gmra.mxu0 %v904
    %v980 = vpop.f32.mrf.mxu0
    %v981 = vadd.f32 0.0, %v980
    %v982 = vpop.f32.mrf.mxu0
    %v983 = vpop.f32.mrf.mxu0
    %v984 = vadd.f32 0.0, %v983
    %v985 = vpop.f32.mrf.mxu0
    %986 = vmatprep.mubr.bf16.mxu0 0
    %987 = vmatmul.mubr.bf16.gmra.mxu0 %v907
    %v988 = vpop.f32.mrf.mxu0
    %v989 = vadd.f32 0.0, %v988
    %v990 = vpop.f32.mrf.mxu0
    %v991 = vpop.f32.mrf.mxu0
    %v992 = vadd.f32 0.0, %v991
    %v993 = vpop.f32.mrf.mxu0
    %994 = vmatprep.mubr.bf16.mxu0 0
    %995 = vmatmul.mubr.bf16.gmra.mxu0 %v910
    %v996 = vpop.f32.mrf.mxu0
    %v997 = vadd.f32 0.0, %v996
    %v998 = vpop.f32.mrf.mxu0
    %v999 = vpop.f32.mrf.mxu0
    %v1000 = vadd.f32 0.0, %v999
    %v1001 = vpop.f32.mrf.mxu0
    %1002 = vmatprep.mubr.bf16.mxu0 0
    %1003 = vmatmul.mubr.bf16.gmra.mxu0 %v913
    %v1004 = vpop.f32.mrf.mxu0
    %v1005 = vadd.f32 0.0, %v1004
    %v1006 = vpop.f32.mrf.mxu0
    %v1007 = vpop.f32.mrf.mxu0
    %v1008 = vadd.f32 0.0, %v1007
    %v1009 = vpop.f32.mrf.mxu0
    %1010 = vmatprep.mubr.bf16.mxu0 0
    %1011 = vmatmul.mubr.bf16.gmra.mxu0 %v916
    %v1012 = vpop.f32.mrf.mxu0
    %v1013 = vadd.f32 0.0, %v1012
    %v1014 = vpop.f32.mrf.mxu0
    %v1015 = vpop.f32.mrf.mxu0
    %v1016 = vadd.f32 0.0, %v1015
    %v1017 = vpop.f32.mrf.mxu0
    %1018 = vdwg.mxu0
    %v1019 = vpack.c.bf16 %v884, %v884
    %v1021 = vsel %vm690, %v1019, 0
    %1023 = vmatprep.subr.bf16.mxu0 0
    %1024 = vmatpush1.bf16.msra.mxu0 0
    %1025 = vmatprep.subr.bf16.mxu0 0
    %1026 = vmatpush1.bf16.msra.mxu0 0
    %1027 = vmatprep.subr.bf16.mxu0 0
    %1028 = vmatpush1.bf16.msra.mxu0 0
    %1029 = vmatprep.subr.bf16.mxu0 0
    %1030 = vmatpush1.bf16.msra.mxu0 0
    %1031 = vmatprep.subr.bf16.mxu0 0
    %1032 = vmatpush1.bf16.msra.mxu0 0
    %1033 = vmatprep.subr.bf16.mxu0 0
    %1034 = vmatpush1.bf16.msra.mxu0 0
    %1035 = vmatprep.subr.bf16.mxu0 0
    %1036 = vmatpush1.bf16.msra.mxu0 0
    %1037 = vmatprep.subr.bf16.mxu0 0
    %1038 = vmatpush1.bf16.msra.mxu0 %v920
    %1039 = vmatprep.subr.bf16.mxu0 0
    %1040 = vmatpush2.bf16.msra.mxu0 0
    %1041 = vmatprep.subr.bf16.mxu0 0
    %1042 = vmatpush2.bf16.msra.mxu0 0
    %1043 = vmatprep.subr.bf16.mxu0 0
    %1044 = vmatpush2.bf16.msra.mxu0 0
    %1045 = vmatprep.subr.bf16.mxu0 0
    %1046 = vmatpush2.bf16.msra.mxu0 0
    %1047 = vmatprep.subr.bf16.mxu0 0
    %1048 = vmatpush2.bf16.msra.mxu0 0
    %1049 = vmatprep.subr.bf16.mxu0 0
    %1050 = vmatpush2.bf16.msra.mxu0 0
    %1051 = vmatprep.subr.bf16.mxu0 0
    %1052 = vmatpush2.bf16.msra.mxu0 0
    %1053 = vmatprep.subr.bf16.mxu0 0
    %1054 = vmatpush2.bf16.msra.mxu0 0
    %1055 = vmatprep.mubr.bf16.mxu0 0
    %1056 = vmatmul.mubr.bf16.gmra.mxu0 %v1021
    %v1057 = vpop.f32.mrf.mxu0
    %v1058 = vadd.f32 0.0, %v1057
    %v1059 = vpop.f32.mrf.mxu0
    %v1060 = vpop.f32.mrf.mxu0
    %v1061 = vpop.f32.mrf.mxu0
    %1062 = vdwg.mxu0
    %1079 = vrot.lane.b32.xlu0 %v274, 96
    %v1080 = vpop.permute.xlu0 %1079
    %1081 = vrot.lane.b32.xlu0 %v277, 96
    %v1082 = vpop.permute.xlu0 %1081
    %1083 = vrot.lane.b32.xlu0 %v282, 96
    %v1084 = vpop.permute.xlu0 %1083
    %1085 = vrot.lane.b32.xlu0 %v285, 96
    %v1086 = vpop.permute.xlu0 %1085
    %1087 = vrot.lane.b32.xlu0 %v290, 96
    %v1088 = vpop.permute.xlu0 %1087
    %1089 = vrot.lane.b32.xlu0 %v293, 96
    %v1090 = vpop.permute.xlu0 %1089
    %1091 = vrot.lane.b32.xlu0 %v298, 96
    %v1092 = vpop.permute.xlu0 %1091
    %1093 = vrot.lane.b32.xlu0 %v301, 96
    %v1094 = vpop.permute.xlu0 %1093
    %1095 = vrot.lane.b32.xlu0 %v306, 96
    %v1096 = vpop.permute.xlu0 %1095
    %1097 = vrot.lane.b32.xlu0 %v309, 96
    %v1098 = vpop.permute.xlu0 %1097
    %1099 = vrot.lane.b32.xlu0 %v314, 96
    %v1100 = vpop.permute.xlu0 %1099
    %1101 = vrot.lane.b32.xlu0 %v317, 96
    %v1102 = vpop.permute.xlu0 %1101
    %1103 = vrot.lane.b32.xlu0 %v322, 96
    %v1104 = vpop.permute.xlu0 %1103
    %1105 = vrot.lane.b32.xlu0 %v325, 96
    %v1106 = vpop.permute.xlu0 %1105
    %1107 = vrot.lane.b32.xlu0 %v330, 96
    %v1108 = vpop.permute.xlu0 %1107
    %1109 = vrot.lane.b32.xlu0 %v333, 96
    %v1110 = vpop.permute.xlu0 %1109
    %v1127 = vmul.f32 %v957, %v1080
    %v1128 = vmul.f32 %v960, %v1082
    %v1129 = vmul.f32 %v965, %v1084
    %v1130 = vmul.f32 %v968, %v1086
    %v1131 = vmul.f32 %v973, %v1088
    %v1132 = vmul.f32 %v976, %v1090
    %v1133 = vmul.f32 %v981, %v1092
    %v1134 = vmul.f32 %v984, %v1094
    %v1135 = vmul.f32 %v989, %v1096
    %v1136 = vmul.f32 %v992, %v1098
    %v1137 = vmul.f32 %v997, %v1100
    %v1138 = vmul.f32 %v1000, %v1102
    %v1139 = vmul.f32 %v1005, %v1104
    %v1140 = vmul.f32 %v1008, %v1106
    %v1141 = vmul.f32 %v1013, %v1108
    %v1142 = vmul.f32 %v1016, %v1110
    %v1143 = vsel %vm72, %v1127, 0.0
    %v1144 = vsel %vm72, %v1128, 0.0
    %v1145 = vadd.f32 %v1143, %v1144
    %v1146 = vsel %vm72, %v1129, 0.0
    %v1147 = vadd.f32 %v1145, %v1146
    %v1148 = vsel %vm72, %v1130, 0.0
    %v1149 = vadd.f32 %v1147, %v1148
    %v1150 = vsel %vm72, %v1131, 0.0
    %v1151 = vadd.f32 %v1149, %v1150
    %v1152 = vsel %vm72, %v1132, 0.0
    %v1153 = vadd.f32 %v1151, %v1152
    %v1154 = vsel %vm72, %v1133, 0.0
    %v1155 = vadd.f32 %v1153, %v1154
    %v1156 = vsel %vm72, %v1134, 0.0
    %v1157 = vadd.f32 %v1155, %v1156
    %v1158 = vrot.slane %v1157, 4
    %v1159 = vadd.f32 %v1157, %v1158
    %v1160 = vrot.slane %v1159, 2
    %v1161 = vadd.f32 %v1159, %v1160
    %v1162 = vrot.slane %v1161, 1
    %v1163 = vadd.f32 %v1161, %v1162
    %v1164 = vsel %vm72, %v1135, 0.0
    %v1165 = vsel %vm72, %v1136, 0.0
    %v1166 = vadd.f32 %v1164, %v1165
    %v1167 = vsel %vm72, %v1137, 0.0
    %v1168 = vadd.f32 %v1166, %v1167
    %v1169 = vsel %vm72, %v1138, 0.0
    %v1170 = vadd.f32 %v1168, %v1169
    %v1171 = vsel %vm72, %v1139, 0.0
    %v1172 = vadd.f32 %v1170, %v1171
    %v1173 = vsel %vm72, %v1140, 0.0
    %v1174 = vadd.f32 %v1172, %v1173
    %v1175 = vsel %vm72, %v1141, 0.0
    %v1176 = vadd.f32 %v1174, %v1175
    %v1177 = vsel %vm72, %v1142, 0.0
    %v1178 = vadd.f32 %v1176, %v1177
    %v1179 = vrot.slane %v1178, 4
    %v1180 = vadd.f32 %v1178, %v1179
    %v1181 = vrot.slane %v1180, 2
    %v1182 = vadd.f32 %v1180, %v1181
    %v1183 = vrot.slane %v1182, 1
    %v1184 = vadd.f32 %v1182, %v1183
    %1186 = vrot.lane.b32.xlu0 %v446, 96
    %v1187 = vpop.permute.xlu0 %1186
    %v1189 = vmul.f32 %v1058, %v1187
    %v1191 = vrot.slane %v1189, 1
    %v1194 = vadd.f32 %v1163, %v1189
    %v1195 = vadd.f32 %v1184, %v1191
    %v1196 = vpack.c.bf16 %v1194, %v1194
    %v1197 = vpack.c.bf16 %v1195, %v1195
    %v1198 = vld [vmem:[%s7] sm:$0xf]
    %v1199 = vld [vmem:[%s7 + $0x4] sm:$0xf]
    %v1200 = vld [vmem:[%s7 + $0x8] sm:$0xf]
    %v1201 = vld [vmem:[%s7 + $0xc] sm:$0xf]
    %v1202 = vld [vmem:[%s8] sm:$0x1]
    %v1204 = vlaneseq
    %v1205 = vshrl.u32 %v1204, 7
    %v1206 = vsub.s32 0, %v1205
    %v1207 = vrot.slane %v1202, %v1206
    %v1211 = vunpack.c.l.b16 %v1196
    %v1212 = vunpack.c.l.b16 %v1197
    %v1213 = vrot.slane %v1212, 7
    %v1214 = vsel %vm352, %v1213, %v1211
    %v1215 = vpack.c.b16 %v1214, %v1214
    %v1220 = vunpack.c.l.b16 %v1198
    %v1221 = vunpack.c.l.b16 %v1199
    %v1222 = vunpack.c.l.b16 %v1200
    %v1223 = vunpack.c.l.b16 %v1201
    %v1224 = vpack.c.b16 %v1221, %v1220
    %v1225 = vpack.c.b16 %v1223, %v1222
    %v1229 = vsel %vm72, %v1215, 0
    %1231 = vmatprep.subr.bf16.mxu0 0
    %1232 = vmatpush1.bf16.msra.mxu0 0
    %1233 = vmatprep.subr.bf16.mxu0 0
    %1234 = vmatpush1.bf16.msra.mxu0 0
    %1235 = vmatprep.subr.bf16.mxu0 0
    %1236 = vmatpush1.bf16.msra.mxu0 0
    %1237 = vmatprep.subr.bf16.mxu0 0
    %1238 = vmatpush1.bf16.msra.mxu0 0
    %1239 = vmatprep.subr.bf16.mxu0 0
    %1240 = vmatpush1.bf16.msra.mxu0 0
    %1241 = vmatprep.subr.bf16.mxu0 0
    %1242 = vmatpush1.bf16.msra.mxu0 0
    %1243 = vmatprep.subr.bf16.mxu0 0
    %1244 = vmatpush1.bf16.msra.mxu0 %v1225
    %1245 = vmatprep.subr.bf16.mxu0 0
    %1246 = vmatpush1.bf16.msra.mxu0 %v1224
    %1247 = vmatprep.subr.bf16.mxu0 0
    %1248 = vmatpush2.bf16.msra.mxu0 0
    %1249 = vmatprep.subr.bf16.mxu0 0
    %1250 = vmatpush2.bf16.msra.mxu0 0
    %1251 = vmatprep.subr.bf16.mxu0 0
    %1252 = vmatpush2.bf16.msra.mxu0 0
    %1253 = vmatprep.subr.bf16.mxu0 0
    %1254 = vmatpush2.bf16.msra.mxu0 0
    %1255 = vmatprep.subr.bf16.mxu0 0
    %1256 = vmatpush2.bf16.msra.mxu0 0
    %1257 = vmatprep.subr.bf16.mxu0 0
    %1258 = vmatpush2.bf16.msra.mxu0 0
    %1259 = vmatprep.subr.bf16.mxu0 0
    %1260 = vmatpush2.bf16.msra.mxu0 0
    %1261 = vmatprep.subr.bf16.mxu0 0
    %1262 = vmatpush2.bf16.msra.mxu0 0
    %1263 = vmatprep.mubr.bf16.mxu0 0
    %1264 = vmatmul.mubr.bf16.gmra.mxu0 %v1229
    %v1265 = vpop.f32.mrf.mxu0
    %v1266 = vadd.f32 %v1207, %v1265
    %v1267 = vpop.f32.mrf.mxu0
    %v1268 = vpop.f32.mrf.mxu0
    %v1269 = vpop.f32.mrf.mxu0
    %1270 = vdwg.mxu0
    %vm1271 = vcmask 517120
    %1272 = vst.msk [vmem:[#allocation2] sm:$0x3] %vm1271, %v1266
    // Predicated region
    $region46: #{tpu_custom_call.1} parent=1 // pred_check
      _
    $region47: #{tpu_custom_call.1} parent=1 // pred_check_branch
      %1274 = sbr.rel (0) target = $region49
    $region48: #{tpu_custom_call.1} parent=1 // pred_region
      %s1276 = ssub.s32 32, 32
      %1277 = vsyncadd [#allocation3], %s1276
      %s1279 = sshll.u32 [#allocation2], 4
      %s1280 = int_to_ptr.vmem [resolvable:$true] %s1279
      %1282 = dma.vmem_to_hbm [thread:$0]  %s1280, 32, %s11, [#allocation3]
    $region49: #{tpu_custom_call.1} parent=1 // pred_fallthru
      _
    // Predicated region
    $region50: #{tpu_custom_call.1} parent=1 // pred_check
      _
    $region51: #{tpu_custom_call.1} parent=1 // pred_check_branch
      %1284 = sbr.rel (0) target = $region53
    $region52: #{tpu_custom_call.1} parent=1 // pred_region
      %1285 = dma.done [#allocation3], 32
    $region53: #{tpu_custom_call.1} parent=1 // pred_fallthru
      _
    %1286 = vsyncpa [#allocation3], 1

</llo_original>
